<compile_context>
chip_gen: v5e
topology: v5e:2x2
jax: 0.10.0
libtpu: 0.0.40
codegen_flags: <defaults>
</compile_context>

<pallas_src>
import functools

import jax
import jax.numpy as jnp
from jax.experimental import pallas as pl
from jax.experimental.pallas import tpu as pltpu


_SQRT_2_OVER_PI = 0.7978845608028654
_INV_SQRT_2 = 0.7071067811865476


def _gelu_new(x):
    # GPT-2 style tanh-approximate gelu (matches easy_transformer's gelu_new).
    return 0.5 * x * (1.0 + jnp.tanh(_SQRT_2_OVER_PI * (x + 0.044715 * x * x * x)))


def _apply_act(name, x):
    if name == "relu":
        return jnp.maximum(x, 0.0)
    if name == "gelu":  # F.gelu default (erf form)
        return 0.5 * x * (1.0 + jax.lax.erf(x * _INV_SQRT_2))
    if name == "gelu_new":
        return _gelu_new(x)
    if name == "silu":
        return x * jax.nn.sigmoid(x)
    raise ValueError(f"unsupported act_fn in fused kernel: {name}")


def _round_up(n, m):
    return ((n + m - 1) // m) * m


def _itemsize(dtype):
    return jnp.dtype(dtype).itemsize


def _tpu_vmem_capacity_bytes():
    try:
        return int(pltpu.get_tpu_info().vmem_capacity_bytes)
    except Exception:
        return 64 << 20  # conservative default: v7x per-TensorCore VMEM


def _vmem_limit_bytes(estimate, cap):
    limit = int(estimate * 1.3) + (2 << 20)
    limit = max(limit, 32 << 20)
    return int(min(limit, max(cap - (2 << 20), 32 << 20)))


def _pick_tm(n_rows, tm):
    """Pick a token-tile size (multiple of 8).  Prefer an exact divisor of n_rows so
    we never materialise a padded HBM copy of the activations."""
    tm = max(8, min(tm, _round_up(n_rows, 8)))
    tm = (tm // 8) * 8
    if n_rows % tm == 0:
        return tm, n_rows
    best = None
    for cand in range(tm, 7, -8):
        if n_rows % cand == 0:
            best = cand
            break
    if best is not None and best >= max(64, tm // 4):
        return best, n_rows
    return tm, _round_up(n_rows, tm)


# ---------------------------------------------------------------------------
# Path A: weights fully resident (constant index_map => fetched once).
# Grid = (token tiles,).  No accumulator needed.
# ---------------------------------------------------------------------------
def _mlp_resident_kernel(x_ref, w_in_ref, b_in_ref, w_out_ref, b_out_ref,
                         out_ref, *, act_fn):
    pre = jnp.dot(x_ref[...].astype(w_in_ref.dtype), w_in_ref[...],
                  preferred_element_type=jnp.float32)
    pre = pre + b_in_ref[...].astype(jnp.float32)
    post = _apply_act(act_fn, pre)
    out = jnp.dot(post.astype(w_out_ref.dtype), w_out_ref[...],
                  preferred_element_type=jnp.float32)
    out_ref[...] = (out + b_out_ref[...].astype(jnp.float32)).astype(out_ref.dtype)


# ---------------------------------------------------------------------------
# Path B: hidden dim streamed as trailing reduction axis into an f32 VMEM
# accumulator.  Grid = (token tiles, hidden tiles).
# ---------------------------------------------------------------------------
def _mlp_streaming_kernel(x_ref, w_in_ref, b_in_ref, w_out_ref, b_out_ref,
                          out_ref, acc_ref, *, act_fn):
    j = pl.program_id(1)

    @pl.when(j == 0)
    def _init():
        acc_ref[...] = jnp.zeros_like(acc_ref)

    pre = jnp.dot(x_ref[...].astype(w_in_ref.dtype), w_in_ref[...],
                  preferred_element_type=jnp.float32)
    pre = pre + b_in_ref[...].astype(jnp.float32)
    post = _apply_act(act_fn, pre)
    acc_ref[...] += jnp.dot(post.astype(w_out_ref.dtype), w_out_ref[...],
                            preferred_element_type=jnp.float32)

    @pl.when(j == pl.num_programs(1) - 1)
    def _finish():
        out_ref[...] = (acc_ref[...] + b_out_ref[...].astype(jnp.float32)
                        ).astype(out_ref.dtype)


# ---------------------------------------------------------------------------
# solu_ln kernel: solu(x) = x * softmax(x, -1), then LayerNorm over d_mlp.
# Needs the full hidden row, so the hidden dim is fully resident per tile.
# ---------------------------------------------------------------------------
def _mlp_solu_ln_kernel(x_ref, w_in_ref, b_in_ref, w_out_ref, b_out_ref,
                        ln_w_ref, ln_b_ref, out_ref, *, eps):
    pre = jnp.dot(x_ref[...].astype(w_in_ref.dtype), w_in_ref[...],
                  preferred_element_type=jnp.float32)
    pre = pre + b_in_ref[...].astype(jnp.float32)

    # solu
    m = jnp.max(pre, axis=-1, keepdims=True)
    e = jnp.exp(pre - m)
    post = pre * (e / jnp.sum(e, axis=-1, keepdims=True))

    # LayerNorm over d_mlp (same formula as the spec's LayerNorm.forward).
    mu = jnp.mean(post, axis=-1, keepdims=True)
    c = post - mu
    inv_scale = jax.lax.rsqrt(jnp.mean(c * c, axis=-1, keepdims=True) + eps)
    normed = (c * inv_scale) * ln_w_ref[...].astype(jnp.float32) \
             + ln_b_ref[...].astype(jnp.float32)

    out = jnp.dot(normed.astype(w_out_ref.dtype), w_out_ref[...],
                  preferred_element_type=jnp.float32)
    out_ref[...] = (out + b_out_ref[...].astype(jnp.float32)).astype(out_ref.dtype)


# ---------------------------------------------------------------------------
# Wrapper
# ---------------------------------------------------------------------------
def mlp_forward(x, W_in, b_in, W_out, b_out, *, act_fn="gelu_new", eps=1e-5,
                ln_w=None, ln_b=None, tm=None, tmlp=256, force_streaming=False):
    """Forward pass of the MLP module.

    x:     [B, S, d_model]
    W_in:  [d_mlp, d_model]   b_in:  [d_mlp]
    W_out: [d_model, d_mlp]   b_out: [d_model]
    ln_w / ln_b: [d_mlp]      (only used for act_fn == 'solu_ln')
    """
    B, S, D = x.shape
    M, D2 = W_in.shape
    assert D2 == D and W_out.shape == (D, M)
    N = B * S

    cap = _tpu_vmem_capacity_bytes()
    if tm is None:
        # Larger token tile on 128 MiB-VMEM chips (v5e/v6e); conservative on v7x.
        tm = 512 if cap >= (96 << 20) else 256

    tm, n_pad = _pick_tm(N, tm)
    x2 = x.reshape(N, D)
    if n_pad != N:
        x2 = jnp.pad(x2, ((0, n_pad - N), (0, 0)))

    # Layout plumbing outside the kernel: row-major matmul operands, 2-D biases.
    w_in_t = W_in.T            # (D, M)
    w_out_t = W_out.T          # (M, D)
    b_in2 = b_in.reshape(1, M)
    b_out2 = b_out.reshape(1, D)

    xb = _itemsize(x.dtype)
    wb = _itemsize(W_in.dtype)
    ob = xb

    if act_fn in ("relu", "gelu", "gelu_new", "silu"):
        # VMEM budget for the resident plan (weights double-buffered by the pipeline
        # even with a constant index_map, so count them twice).
        est_res = (2 * tm * D * (xb + ob)          # x / out tiles
                   + 2 * (D * M + M * D) * wb      # W_in^T + W_out^T pipeline buffers
                   + 2 * (M + D) * wb              # biases
                   + 2 * tm * M * 4)               # f32 pre/post intermediates
        resident_ok = (not force_streaming) and est_res <= int(0.7 * cap)

        if resident_ok:
            out = pl.pallas_call(
                functools.partial(_mlp_resident_kernel, act_fn=act_fn),
                out_shape=jax.ShapeDtypeStruct((n_pad, D), x.dtype),
                grid_spec=pltpu.PrefetchScalarGridSpec(
                    num_scalar_prefetch=0,
                    grid=(n_pad // tm,),
                    in_specs=[
                        pl.BlockSpec((tm, D), lambda i: (i, 0)),   # x rows
                        pl.BlockSpec((D, M), lambda i: (0, 0)),    # W_in^T (resident)
                        pl.BlockSpec((1, M), lambda i: (0, 0)),    # b_in
                        pl.BlockSpec((M, D), lambda i: (0, 0)),    # W_out^T (resident)
                        pl.BlockSpec((1, D), lambda i: (0, 0)),    # b_out
                    ],
                    out_specs=pl.BlockSpec((tm, D), lambda i: (i, 0)),
                ),
                compiler_params=pltpu.CompilerParams(
                    dimension_semantics=("parallel",),
                    vmem_limit_bytes=_vmem_limit_bytes(est_res, cap)),
            )(x2, w_in_t, b_in2, w_out_t, b_out2)
        else:
            # Streaming plan: pad d_mlp up to a multiple of tmlp (padded W_out^T rows
            # are zero, so the padded hidden columns contribute exactly 0).
            tmlp = max(128, (min(tmlp, _round_up(M, 128)) // 128) * 128)
            m_pad = _round_up(M, tmlp)
            if m_pad != M:
                w_in_t = jnp.pad(w_in_t, ((0, 0), (0, m_pad - M)))
                b_in2 = jnp.pad(b_in2, ((0, 0), (0, m_pad - M)))
                w_out_t = jnp.pad(w_out_t, ((0, m_pad - M), (0, 0)))
            n_hidden_tiles = m_pad // tmlp

            est_str = (2 * tm * D * (xb + ob)
                       + 2 * (D * tmlp + tmlp * D) * wb
                       + 2 * (tmlp + D) * wb
                       + tm * D * 4                 # f32 accumulator scratch
                       + 2 * tm * tmlp * 4)         # f32 intermediates
            # TODO(synk): if xprof shows exposed DMA on the weight tiles, add
            # pipeline_mode=pl.Buffered(3) on the two weight BlockSpecs.
            out = pl.pallas_call(
                functools.partial(_mlp_streaming_kernel, act_fn=act_fn),
                out_shape=jax.ShapeDtypeStruct((n_pad, D), x.dtype),
                grid_spec=pltpu.PrefetchScalarGridSpec(
                    num_scalar_prefetch=0,
                    grid=(n_pad // tm, n_hidden_tiles),
                    in_specs=[
                        pl.BlockSpec((tm, D), lambda i, j: (i, 0)),    # x rows
                        pl.BlockSpec((D, tmlp), lambda i, j: (0, j)),  # W_in^T tile
                        pl.BlockSpec((1, tmlp), lambda i, j: (0, j)),  # b_in tile
                        pl.BlockSpec((tmlp, D), lambda i, j: (j, 0)),  # W_out^T tile
                        pl.BlockSpec((1, D), lambda i, j: (0, 0)),     # b_out
                    ],
                    out_specs=pl.BlockSpec((tm, D), lambda i, j: (i, 0)),
                    scratch_shapes=[pltpu.VMEM((tm, D), jnp.float32)],
                ),
                compiler_params=pltpu.CompilerParams(
                    dimension_semantics=("parallel", "arbitrary"),
                    vmem_limit_bytes=_vmem_limit_bytes(est_str, cap)),
            )(x2, w_in_t, b_in2, w_out_t, b_out2)

        return out[:N].reshape(B, S, D)

    elif act_fn == "solu_ln":
        assert ln_w is not None and ln_b is not None
        # Softmax + LayerNorm need the full d_mlp row resident, so shrink the token
        # tile to keep the (tm, M) f32 intermediates bounded.
        tm_s = min(tm, 128)
        tm_s, n_pad_s = _pick_tm(N, tm_s)
        x2s = x.reshape(N, D)
        if n_pad_s != N:
            x2s = jnp.pad(x2s, ((0, n_pad_s - N), (0, 0)))
        ln_w2 = ln_w.reshape(1, M)
        ln_b2 = ln_b.reshape(1, M)

        est = (2 * tm_s * D * (xb + ob)
               + 2 * (D * M + M * D) * wb
               + 2 * (3 * M + D) * wb
               + 3 * tm_s * M * 4)
        # TODO(synk): for very large d_mlp this single-pass layout exceeds VMEM
        # (notably v7x's 64 MiB); a two-pass online-softmax/LN-stats variant that
        # tiles d_mlp would be required there.
        out = pl.pallas_call(
            functools.partial(_mlp_solu_ln_kernel, eps=eps),
            out_shape=jax.ShapeDtypeStruct((n_pad_s, D), x.dtype),
            grid_spec=pltpu.PrefetchScalarGridSpec(
                num_scalar_prefetch=0,
                grid=(n_pad_s // tm_s,),
                in_specs=[
                    pl.BlockSpec((tm_s, D), lambda i: (i, 0)),  # x rows
                    pl.BlockSpec((D, M), lambda i: (0, 0)),     # W_in^T (resident)
                    pl.BlockSpec((1, M), lambda i: (0, 0)),     # b_in
                    pl.BlockSpec((M, D), lambda i: (0, 0)),     # W_out^T (resident)
                    pl.BlockSpec((1, D), lambda i: (0, 0)),     # b_out
                    pl.BlockSpec((1, M), lambda i: (0, 0)),     # ln_w
                    pl.BlockSpec((1, M), lambda i: (0, 0)),     # ln_b
                ],
                out_specs=pl.BlockSpec((tm_s, D), lambda i: (i, 0)),
            ),
            compiler_params=pltpu.CompilerParams(
                dimension_semantics=("parallel",),
                vmem_limit_bytes=_vmem_limit_bytes(est, cap)),
        )(x2s, w_in_t, b_in2, w_out_t, b_out2, ln_w2, ln_b2)
        return out[:N].reshape(B, S, D)

    else:
        # TODO(synk): act_fn == 'glu' halves the hidden dim (shape-changing gate) and
        # has no clean fit in this fused layout; not implemented.
        raise ValueError(f"Unsupported act_fn: {act_fn}")


# ---------------------------------------------------------------------------
# Pure-JAX reference (mirrors the PyTorch module) + self-test
# ---------------------------------------------------------------------------
def mlp_reference(x, W_in, b_in, W_out, b_out, act_fn, eps=1e-5, ln_w=None, ln_b=None):
    pre = jnp.einsum("md,bpd->bpm", W_in, x) + b_in
    if act_fn == "relu":
        post = jnp.maximum(pre, 0.0)
    elif act_fn == "gelu":
        post = 0.5 * pre * (1.0 + jax.lax.erf(pre * _INV_SQRT_2))
    elif act_fn == "gelu_new":
        post = _gelu_new(pre)
    elif act_fn == "silu":
        post = pre * jax.nn.sigmoid(pre)
    elif act_fn == "solu_ln":
        post = pre * jax.nn.softmax(pre, axis=-1)
        mu = post.mean(-1, keepdims=True)
        c = post - mu
        scale = jnp.sqrt((c * c).mean(-1, keepdims=True) + eps)
        post = c / scale * ln_w + ln_b
    else:
        raise ValueError(act_fn)
    return jnp.einsum("dm,bpm->bpd", W_out, post) + b_out


if __name__ == "__main__":
    key = jax.random.PRNGKey(0)
    ks = jax.random.split(key, 7)

    B, S, d_model, d_mlp = 2, 128, 128, 512
    eps = 1e-5

    x = jax.random.normal(ks[0], (B, S, d_model), dtype=jnp.float32)
    W_in = 0.02 * jax.random.normal(ks[1], (d_mlp, d_model), dtype=jnp.float32)
    b_in = 0.02 * jax.random.normal(ks[2], (d_mlp,), dtype=jnp.float32)
    W_out = 0.02 * jax.random.normal(ks[3], (d_model, d_mlp), dtype=jnp.float32)
    b_out = 0.02 * jax.random.normal(ks[4], (d_model,), dtype=jnp.float32)
    ln_w = 1.0 + 0.1 * jax.random.normal(ks[5], (d_mlp,), dtype=jnp.float32)
    ln_b = 0.1 * jax.random.normal(ks[6], (d_mlp,), dtype=jnp.float32)

    def check(out, ref, tag):
        out = jax.block_until_ready(out)
        assert out.shape == ref.shape, tag
        max_err = float(jnp.max(jnp.abs(out - ref)))
        assert jnp.allclose(out, ref, atol=2e-2, rtol=2e-2), (tag, max_err)

    # Resident-weight path, all supported activations.
    for act in ("relu", "gelu", "gelu_new", "silu", "solu_ln"):
        out = mlp_forward(x, W_in, b_in, W_out, b_out, act_fn=act, eps=eps,
                          ln_w=ln_w, ln_b=ln_b, tm=256)
        ref = mlp_reference(x, W_in, b_in, W_out, b_out, act, eps=eps,
                            ln_w=ln_w, ln_b=ln_b)
        check(out, ref, act)

    # Hidden-streaming path (forced), without and with d_mlp zero-padding.
    for tmlp in (128, 384):
        out = mlp_forward(x, W_in, b_in, W_out, b_out, act_fn="gelu_new",
                          tm=256, tmlp=tmlp, force_streaming=True)
        ref = mlp_reference(x, W_in, b_in, W_out, b_out, "gelu_new")
        check(out, ref, f"stream_tmlp{tmlp}")

    # Token count that does not divide the tile (exercises row padding).
    x_odd = jax.random.normal(ks[0], (1, 100, d_model), dtype=jnp.float32)
    out = mlp_forward(x_odd, W_in, b_in, W_out, b_out, act_fn="relu", tm=256)
    ref = mlp_reference(x_odd, W_in, b_in, W_out, b_out, "relu")
    check(out, ref, "odd_tokens")

    print("KERNEL_OK")
</pallas_src>

<mosaic_0001>
module attributes {stable_mosaic.version = 11 : i64} {
  func.func @_mlp_resident_kernel(%arg0: i32, %arg1: memref<256x128xf32, #tpu.memory_space<vmem>>, %arg2: memref<128x512xf32, #tpu.memory_space<vmem>>, %arg3: memref<1x512xf32, #tpu.memory_space<vmem>>, %arg4: memref<512x128xf32, #tpu.memory_space<vmem>>, %arg5: memref<1x128xf32, #tpu.memory_space<vmem>>, %arg6: memref<256x128xf32, #tpu.memory_space<vmem>>) attributes {dimension_semantics = [#tpu.dimension_semantics<parallel>], iteration_bounds = array<i64: 1>, scalar_prefetch = 0 : i64, scratch_operands = 0 : i64, tpu.core_type = #tpu.core_type<tc>, window_params = [{transform_indices = @transform_0, window_bounds = array<i64: 256, 128>}, {pipeline_mode = #tpu.pipeline_mode<synchronous>, transform_indices = @transform_1, window_bounds = array<i64: 128, 512>}, {pipeline_mode = #tpu.pipeline_mode<synchronous>, transform_indices = @transform_2, window_bounds = array<i64: 1, 512>}, {pipeline_mode = #tpu.pipeline_mode<synchronous>, transform_indices = @transform_3, window_bounds = array<i64: 512, 128>}, {pipeline_mode = #tpu.pipeline_mode<synchronous>, transform_indices = @transform_4, window_bounds = array<i64: 1, 128>}, {transform_indices = @transform_5, window_bounds = array<i64: 256, 128>}]} {
    %c0 = arith.constant 0 : index
    %c0_0 = arith.constant 0 : index
    %0 = vector.load %arg1[%c0, %c0_0] : memref<256x128xf32, #tpu.memory_space<vmem>>, vector<256x128xf32>
    %c0_1 = arith.constant 0 : index
    %c0_2 = arith.constant 0 : index
    %1 = vector.load %arg2[%c0_1, %c0_2] : memref<128x512xf32, #tpu.memory_space<vmem>>, vector<128x512xf32>
    %cst = arith.constant dense<0.000000e+00> : vector<256x512xf32>
    %2 = tpu.matmul %0, %1, %cst {dimension_numbers = #tpu.dot_dimension_numbers<[1], [0], [0], [1], [0, 0, 1, 1], [], []>} : vector<256x128xf32>, vector<128x512xf32>, vector<256x512xf32> -> vector<256x512xf32>
    %c0_3 = arith.constant 0 : index
    %c0_4 = arith.constant 0 : index
    %3 = vector.load %arg3[%c0_3, %c0_4] : memref<1x512xf32, #tpu.memory_space<vmem>>, vector<1x512xf32>
    %4 = vector.broadcast %3 : vector<1x512xf32> to vector<256x512xf32>
    %5 = arith.addf %2, %4 : vector<256x512xf32>
    %cst_5 = arith.constant 0.000000e+00 : f32
    %6 = vector.broadcast %cst_5 : f32 to vector<256x512xf32>
    %7 = arith.maximumf %5, %6 : vector<256x512xf32>
    %c0_6 = arith.constant 0 : index
    %c0_7 = arith.constant 0 : index
    %8 = vector.load %arg4[%c0_6, %c0_7] : memref<512x128xf32, #tpu.memory_space<vmem>>, vector<512x128xf32>
    %cst_8 = arith.constant dense<0.000000e+00> : vector<256x128xf32>
    %9 = tpu.matmul %7, %8, %cst_8 {dimension_numbers = #tpu.dot_dimension_numbers<[1], [0], [0], [1], [0, 0, 1, 1], [], []>} : vector<256x512xf32>, vector<512x128xf32>, vector<256x128xf32> -> vector<256x128xf32>
    %c0_9 = arith.constant 0 : index
    %c0_10 = arith.constant 0 : index
    %10 = vector.load %arg5[%c0_9, %c0_10] : memref<1x128xf32, #tpu.memory_space<vmem>>, vector<1x128xf32>
    %11 = vector.broadcast %10 : vector<1x128xf32> to vector<256x128xf32>
    %12 = arith.addf %9, %11 : vector<256x128xf32>
    %c0_11 = arith.constant 0 : index
    %c0_12 = arith.constant 0 : index
    %13 = vector.load %arg6[%c0_11, %c0_12] : memref<256x128xf32, #tpu.memory_space<vmem>>, vector<256x128xf32>
    tpu.vector_store %arg6[%c0_11, %c0_12], %12 {strides = array<i32>} : memref<256x128xf32, #tpu.memory_space<vmem>>, vector<256x128xf32>,
    return
  }
  func.func @transform_0(%arg0: i32) -> (i32, i32) {
    %c0_i32 = arith.constant 0 : i32
    %c0_i32_0 = arith.constant 0 : i32
    return %arg0, %c0_i32 : i32, i32
  }
  func.func @transform_1(%arg0: i32) -> (i32, i32) {
    %c0_i32 = arith.constant 0 : i32
    %c0_i32_0 = arith.constant 0 : i32
    %c0_i32_1 = arith.constant 0 : i32
    return %c0_i32, %c0_i32_0 : i32, i32
  }
  func.func @transform_2(%arg0: i32) -> (i32, i32) {
    %c0_i32 = arith.constant 0 : i32
    %c0_i32_0 = arith.constant 0 : i32
    %c0_i32_1 = arith.constant 0 : i32
    return %c0_i32, %c0_i32_0 : i32, i32
  }
  func.func @transform_3(%arg0: i32) -> (i32, i32) {
    %c0_i32 = arith.constant 0 : i32
    %c0_i32_0 = arith.constant 0 : i32
    %c0_i32_1 = arith.constant 0 : i32
    return %c0_i32, %c0_i32_0 : i32, i32
  }
  func.func @transform_4(%arg0: i32) -> (i32, i32) {
    %c0_i32 = arith.constant 0 : i32
    %c0_i32_0 = arith.constant 0 : i32
    %c0_i32_1 = arith.constant 0 : i32
    return %c0_i32, %c0_i32_0 : i32, i32
  }
  func.func @transform_5(%arg0: i32) -> (i32, i32) {
    %c0_i32 = arith.constant 0 : i32
    %c0_i32_0 = arith.constant 0 : i32
    return %arg0, %c0_i32 : i32, i32
  }
}

</mosaic_0001>

<llo_original>
// kernel: tpu_custom_call.1
$region0: #{tpu_custom_call.1}
  #allocation0 [shape = 'u32[]', space=smem, size = 0x4, offset = 0x4, fixed_abs, tag = 'smem constant byte address 0x4 - core index']
  #allocation1 [shape = 'u32[72,128]{1,0:T(1,128)}', space=vmem, size = 0x9000, scoped, tag = 'internal scratch']
  %s0 = inlined_call_operand.hbm [shape: f32[256,128], index: 0, kind: input, shape index: {}]
  %s1 = inlined_call_operand.hbm [shape: f32[128,512], index: 1, kind: input, shape index: {}]
  %s2 = inlined_call_operand.hbm [shape: f32[1,512], index: 2, kind: input, shape index: {}]
  %s3 = inlined_call_operand.hbm [shape: f32[512,128], index: 3, kind: input, shape index: {}]
  %s4 = inlined_call_operand.vmem [shape: f32[1,128], index: 4, kind: input, shape index: {}]
  %s5 = inlined_call_operand.hbm [shape: f32[256,128], index: 5, kind: output, shape index: {}]
  %s6 = sld [smem:[#allocation0]]
  $region46: #{tpu_custom_call.1} parent=0
    _
  %s8 = ssub.s32 1, %s6
  %s9 = scalar_select 0, %s8, %s6
  $region1: #{tpu_custom_call.1} parent=0
    #allocation2 [shape = 'u8[131072]{0}', space=vmem, size = 0x20000, scoped, tag = 'input window, operand 0, single buffered']
    #allocation3 [shape = 's32[1]{0}', space=sflag, size = 0x4, scoped, tag = 'scoped memory for tpu_custom_call.1']
    #allocation4 [shape = 's32[1]{0}', space=sflag, size = 0x4, scoped, tag = 'scoped memory for tpu_custom_call.1']
    #allocation5 [shape = 'u8[262144]{0}', space=vmem, size = 0x40000, scoped, tag = 'input window, operand 1, single buffered']
    #allocation6 [shape = 's32[1]{0}', space=sflag, size = 0x4, scoped, tag = 'scoped memory for tpu_custom_call.1']
    #allocation7 [shape = 'u8[2048]{0}', space=vmem, size = 0x800, scoped, tag = 'input window, operand 2, single buffered']
    #allocation8 [shape = 'u8[262144]{0}', space=vmem, size = 0x40000, scoped, tag = 'input window, operand 3, single buffered']
    #allocation9 [shape = 's32[1]{0}', space=sflag, size = 0x4, scoped, tag = 'scoped memory for tpu_custom_call.1']
    #allocation10 [shape = 'u8[131072]{0}', space=vmem, size = 0x20000, scoped, tag = 'output window, operand 0, single buffered']
    %10 = vsyncpa [#allocation3], 0
    %11 = vsyncpa [#allocation6], 0
    %12 = vsyncpa [#allocation9], 0
    %13 = vsyncpa [#allocation4], 0
    // Predicated region
    $region2: #{tpu_custom_call.1} parent=1 // pred_check
      _
    $region3: #{tpu_custom_call.1} parent=1 // pred_check_branch
      %15 = sbr.rel (0) target = $region5
    $region4: #{tpu_custom_call.1} parent=1 // pred_region
      %17 = vsyncadd [#allocation3], 0
      %s18 = sshll.u32 %s0, 4
      %s19 = int_to_ptr.hbm [resolvable:$true] %s18
      %s20 = sshll.u32 [#allocation2], 4
      %s21 = int_to_ptr.vmem [resolvable:$true] %s20
      %26 = dma.hbm_to_vmem [thread:$0]  %s19, 4096, %s21, [#allocation3], 128, 128, 8
    $region5: #{tpu_custom_call.1} parent=1 // pred_fallthru
      _
    // Predicated region
    $region6: #{tpu_custom_call.1} parent=1 // pred_check
      _
    $region7: #{tpu_custom_call.1} parent=1 // pred_check_branch
      %28 = sbr.rel (0) target = $region9
    $region8: #{tpu_custom_call.1} parent=1 // pred_region
      %30 = vsyncadd [#allocation6], 0
      %s31 = sshll.u32 %s1, 4
      %s32 = int_to_ptr.hbm [resolvable:$true] %s31
      %s33 = sshll.u32 [#allocation5], 4
      %s34 = int_to_ptr.vmem [resolvable:$true] %s33
      %39 = dma.hbm_to_vmem [thread:$0]  %s32, 8192, %s34, [#allocation6], 512, 512, 32
    $region9: #{tpu_custom_call.1} parent=1 // pred_fallthru
      _
    // Predicated region
    $region10: #{tpu_custom_call.1} parent=1 // pred_check
      _
    $region11: #{tpu_custom_call.1} parent=1 // pred_check_branch
      %41 = sbr.rel (0) target = $region13
    $region12: #{tpu_custom_call.1} parent=1 // pred_region
      %43 = vsyncadd [#allocation6], 0
      %s45 = sshll.u32 %s2, 4
      %s46 = int_to_ptr.hbm [resolvable:$true] %s45
      %s47 = sshll.u32 [#allocation7], 4
      %s48 = int_to_ptr.vmem [resolvable:$true] %s47
      %50 = dma.hbm_to_vmem [thread:$0]  %s46, 64, %s48, [#allocation6]
    $region13: #{tpu_custom_call.1} parent=1 // pred_fallthru
      _
    // Predicated region
    $region14: #{tpu_custom_call.1} parent=1 // pred_check
      _
    $region15: #{tpu_custom_call.1} parent=1 // pred_check_branch
      %52 = sbr.rel (0) target = $region17
    $region16: #{tpu_custom_call.1} parent=1 // pred_region
      %54 = vsyncadd [#allocation9], 0
      %s55 = sshll.u32 %s3, 4
      %s56 = int_to_ptr.hbm [resolvable:$true] %s55
      %s57 = sshll.u32 [#allocation8], 4
      %s58 = int_to_ptr.vmem [resolvable:$true] %s57
      %63 = dma.hbm_to_vmem [thread:$0]  %s56, 8192, %s58, [#allocation9], 128, 128, 8
    $region17: #{tpu_custom_call.1} parent=1 // pred_fallthru
      _
    // Predicated region
    $region18: #{tpu_custom_call.1} parent=1 // pred_check
      _
    $region19: #{tpu_custom_call.1} parent=1 // pred_check_branch
      %65 = sbr.rel (0) target = $region21
    $region20: #{tpu_custom_call.1} parent=1 // pred_region
      _
    $region21: #{tpu_custom_call.1} parent=1 // pred_fallthru
      _
    // Predicated region
    $region22: #{tpu_custom_call.1} parent=1 // pred_check
      _
    $region23: #{tpu_custom_call.1} parent=1 // pred_check_branch
      %67 = sbr.rel (0) target = $region25
    $region24: #{tpu_custom_call.1} parent=1 // pred_region
      %69 = dma.done [#allocation3], 4096
    $region25: #{tpu_custom_call.1} parent=1 // pred_fallthru
      _
    // Predicated region
    $region26: #{tpu_custom_call.1} parent=1 // pred_check
      _
    $region27: #{tpu_custom_call.1} parent=1 // pred_check_branch
      %71 = sbr.rel (0) target = $region29
    $region28: #{tpu_custom_call.1} parent=1 // pred_region
      %73 = dma.done [#allocation6], 8192
    $region29: #{tpu_custom_call.1} parent=1 // pred_fallthru
      _
    // Predicated region
    $region30: #{tpu_custom_call.1} parent=1 // pred_check
      _
    $region31: #{tpu_custom_call.1} parent=1 // pred_check_branch
      %75 = sbr.rel (0) target = $region33
    $region32: #{tpu_custom_call.1} parent=1 // pred_region
      %77 = dma.done [#allocation6], 64
    $region33: #{tpu_custom_call.1} parent=1 // pred_fallthru
      _
    // Predicated region
    $region34: #{tpu_custom_call.1} parent=1 // pred_check
      _
    $region35: #{tpu_custom_call.1} parent=1 // pred_check_branch
      %79 = sbr.rel (0) target = $region37
    $region36: #{tpu_custom_call.1} parent=1 // pred_region
      %81 = dma.done [#allocation9], 8192
    $region37: #{tpu_custom_call.1} parent=1 // pred_fallthru
      _
    %v82 = vld [vmem:[#allocation2] sm:$0xff]
    %v83 = vld [vmem:[#allocation2 + $0x8] sm:$0xff]
    %v84 = vld [vmem:[#allocation2 + $0x10] sm:$0xff]
    %v85 = vld [vmem:[#allocation2 + $0x18] sm:$0xff]
    %v86 = vld [vmem:[#allocation2 + $0x20] sm:$0xff]
    %v87 = vld [vmem:[#allocation2 + $0x28] sm:$0xff]
    %v88 = vld [vmem:[#allocation2 + $0x30] sm:$0xff]
    %v89 = vld [vmem:[#allocation2 + $0x38] sm:$0xff]
    %v90 = vld [vmem:[#allocation2 + $0x40] sm:$0xff]
    %v91 = vld [vmem:[#allocation2 + $0x48] sm:$0xff]
    %v92 = vld [vmem:[#allocation2 + $0x50] sm:$0xff]
    %v93 = vld [vmem:[#allocation2 + $0x58] sm:$0xff]
    %v94 = vld [vmem:[#allocation2 + $0x60] sm:$0xff]
    %v95 = vld [vmem:[#allocation2 + $0x68] sm:$0xff]
    %v96 = vld [vmem:[#allocation2 + $0x70] sm:$0xff]
    %v97 = vld [vmem:[#allocation2 + $0x78] sm:$0xff]
    %v98 = vld [vmem:[#allocation2 + $0x80] sm:$0xff]
    %v99 = vld [vmem:[#allocation2 + $0x88] sm:$0xff]
    %v100 = vld [vmem:[#allocation2 + $0x90] sm:$0xff]
    %v101 = vld [vmem:[#allocation2 + $0x98] sm:$0xff]
    %v102 = vld [vmem:[#allocation2 + $0xa0] sm:$0xff]
    %v103 = vld [vmem:[#allocation2 + $0xa8] sm:$0xff]
    %v104 = vld [vmem:[#allocation2 + $0xb0] sm:$0xff]
    %v105 = vld [vmem:[#allocation2 + $0xb8] sm:$0xff]
    %v106 = vld [vmem:[#allocation2 + $0xc0] sm:$0xff]
    %v107 = vld [vmem:[#allocation2 + $0xc8] sm:$0xff]
    %v108 = vld [vmem:[#allocation2 + $0xd0] sm:$0xff]
    %v109 = vld [vmem:[#allocation2 + $0xd8] sm:$0xff]
    %v110 = vld [vmem:[#allocation2 + $0xe0] sm:$0xff]
    %v111 = vld [vmem:[#allocation2 + $0xe8] sm:$0xff]
    %v112 = vld [vmem:[#allocation2 + $0xf0] sm:$0xff]
    %v113 = vld [vmem:[#allocation2 + $0xf8] sm:$0xff]
    %v114 = vld [vmem:[#allocation5] sm:$0xff]
    %v115 = vld [vmem:[#allocation5 + $0x8] sm:$0xff]
    %v116 = vld [vmem:[#allocation5 + $0x10] sm:$0xff]
    %v117 = vld [vmem:[#allocation5 + $0x18] sm:$0xff]
    %v118 = vld [vmem:[#allocation5 + $0x20] sm:$0xff]
    %v119 = vld [vmem:[#allocation5 + $0x28] sm:$0xff]
    %v120 = vld [vmem:[#allocation5 + $0x30] sm:$0xff]
    %v121 = vld [vmem:[#allocation5 + $0x38] sm:$0xff]
    %v122 = vld [vmem:[#allocation5 + $0x40] sm:$0xff]
    %v123 = vld [vmem:[#allocation5 + $0x48] sm:$0xff]
    %v124 = vld [vmem:[#allocation5 + $0x50] sm:$0xff]
    %v125 = vld [vmem:[#allocation5 + $0x58] sm:$0xff]
    %v126 = vld [vmem:[#allocation5 + $0x60] sm:$0xff]
    %v127 = vld [vmem:[#allocation5 + $0x68] sm:$0xff]
    %v128 = vld [vmem:[#allocation5 + $0x70] sm:$0xff]
    %v129 = vld [vmem:[#allocation5 + $0x78] sm:$0xff]
    %v130 = vld [vmem:[#allocation5 + $0x80] sm:$0xff]
    %v131 = vld [vmem:[#allocation5 + $0x88] sm:$0xff]
    %v132 = vld [vmem:[#allocation5 + $0x90] sm:$0xff]
    %v133 = vld [vmem:[#allocation5 + $0x98] sm:$0xff]
    %v134 = vld [vmem:[#allocation5 + $0xa0] sm:$0xff]
    %v135 = vld [vmem:[#allocation5 + $0xa8] sm:$0xff]
    %v136 = vld [vmem:[#allocation5 + $0xb0] sm:$0xff]
    %v137 = vld [vmem:[#allocation5 + $0xb8] sm:$0xff]
    %v138 = vld [vmem:[#allocation5 + $0xc0] sm:$0xff]
    %v139 = vld [vmem:[#allocation5 + $0xc8] sm:$0xff]
    %v140 = vld [vmem:[#allocation5 + $0xd0] sm:$0xff]
    %v141 = vld [vmem:[#allocation5 + $0xd8] sm:$0xff]
    %v142 = vld [vmem:[#allocation5 + $0xe0] sm:$0xff]
    %v143 = vld [vmem:[#allocation5 + $0xe8] sm:$0xff]
    %v144 = vld [vmem:[#allocation5 + $0xf0] sm:$0xff]
    %v145 = vld [vmem:[#allocation5 + $0xf8] sm:$0xff]
    %v146 = vld [vmem:[#allocation5 + $0x100] sm:$0xff]
    %v147 = vld [vmem:[#allocation5 + $0x108] sm:$0xff]
    %v148 = vld [vmem:[#allocation5 + $0x110] sm:$0xff]
    %v149 = vld [vmem:[#allocation5 + $0x118] sm:$0xff]
    %v150 = vld [vmem:[#allocation5 + $0x120] sm:$0xff]
    %v151 = vld [vmem:[#allocation5 + $0x128] sm:$0xff]
    %v152 = vld [vmem:[#allocation5 + $0x130] sm:$0xff]
    %v153 = vld [vmem:[#allocation5 + $0x138] sm:$0xff]
    %v154 = vld [vmem:[#allocation5 + $0x140] sm:$0xff]
    %v155 = vld [vmem:[#allocation5 + $0x148] sm:$0xff]
    %v156 = vld [vmem:[#allocation5 + $0x150] sm:$0xff]
    %v157 = vld [vmem:[#allocation5 + $0x158] sm:$0xff]
    %v158 = vld [vmem:[#allocation5 + $0x160] sm:$0xff]
    %v159 = vld [vmem:[#allocation5 + $0x168] sm:$0xff]
    %v160 = vld [vmem:[#allocation5 + $0x170] sm:$0xff]
    %v161 = vld [vmem:[#allocation5 + $0x178] sm:$0xff]
    %v162 = vld [vmem:[#allocation5 + $0x180] sm:$0xff]
    %v163 = vld [vmem:[#allocation5 + $0x188] sm:$0xff]
    %v164 = vld [vmem:[#allocation5 + $0x190] sm:$0xff]
    %v165 = vld [vmem:[#allocation5 + $0x198] sm:$0xff]
    %v166 = vld [vmem:[#allocation5 + $0x1a0] sm:$0xff]
    %v167 = vld [vmem:[#allocation5 + $0x1a8] sm:$0xff]
    %v168 = vld [vmem:[#allocation5 + $0x1b0] sm:$0xff]
    %v169 = vld [vmem:[#allocation5 + $0x1b8] sm:$0xff]
    %v170 = vld [vmem:[#allocation5 + $0x1c0] sm:$0xff]
    %v171 = vld [vmem:[#allocation5 + $0x1c8] sm:$0xff]
    %v172 = vld [vmem:[#allocation5 + $0x1d0] sm:$0xff]
    %v173 = vld [vmem:[#allocation5 + $0x1d8] sm:$0xff]
    %v174 = vld [vmem:[#allocation5 + $0x1e0] sm:$0xff]
    %v175 = vld [vmem:[#allocation5 + $0x1e8] sm:$0xff]
    %v176 = vld [vmem:[#allocation5 + $0x1f0] sm:$0xff]
    %v177 = vld [vmem:[#allocation5 + $0x1f8] sm:$0xff]
    %v178 = vld [vmem:[#allocation7] sm:$0xf]
    %v180 = vperm.slane %v178, 0
    %v181 = vperm.slane %v178, 1
    %v182 = vperm.slane %v178, 2
    %v183 = vperm.slane %v178, 3
    %188 = vmatpush.msra.mxu0 %v174
    %189 = vmatpush.msra.mxu0 %v170
    %190 = vmatpush.msra.mxu0 %v166
    %191 = vmatpush.msra.mxu0 %v162
    %192 = vmatpush.msra.mxu0 %v158
    %193 = vmatpush.msra.mxu0 %v154
    %194 = vmatpush.msra.mxu0 %v150
    %195 = vmatpush.msra.mxu0 %v146
    %196 = vmatpush.msra.mxu0 %v142
    %197 = vmatpush.msra.mxu0 %v138
    %198 = vmatpush.msra.mxu0 %v134
    %199 = vmatpush.msra.mxu0 %v130
    %200 = vmatpush.msra.mxu0 %v126
    %201 = vmatpush.msra.mxu0 %v122
    %202 = vmatpush.msra.mxu0 %v118
    %203 = vmatpush.msra.mxu0 %v114
    %204 = vmatmul.f32.gmra.mxu0 %v82
    %v205 = vpop.f32.mrf.mxu0
    %v206 = vadd.f32 %v180, %v205
    %207 = vmatmul.f32.gmra.mxu0 %v83
    %v208 = vpop.f32.mrf.mxu0
    %v209 = vadd.f32 %v180, %v208
    %210 = vmatmul.f32.gmra.mxu0 %v84
    %v211 = vpop.f32.mrf.mxu0
    %v212 = vadd.f32 %v180, %v211
    %213 = vmatmul.f32.gmra.mxu0 %v85
    %v214 = vpop.f32.mrf.mxu0
    %v215 = vadd.f32 %v180, %v214
    %216 = vmatmul.f32.gmra.mxu0 %v86
    %v217 = vpop.f32.mrf.mxu0
    %v218 = vadd.f32 %v180, %v217
    %219 = vmatmul.f32.gmra.mxu0 %v87
    %v220 = vpop.f32.mrf.mxu0
    %v221 = vadd.f32 %v180, %v220
    %222 = vmatmul.f32.gmra.mxu0 %v88
    %v223 = vpop.f32.mrf.mxu0
    %v224 = vadd.f32 %v180, %v223
    %225 = vmatmul.f32.gmra.mxu0 %v89
    %v226 = vpop.f32.mrf.mxu0
    %v227 = vadd.f32 %v180, %v226
    %228 = vmatmul.f32.gmra.mxu0 %v90
    %v229 = vpop.f32.mrf.mxu0
    %v230 = vadd.f32 %v180, %v229
    %231 = vmatmul.f32.gmra.mxu0 %v91
    %v232 = vpop.f32.mrf.mxu0
    %v233 = vadd.f32 %v180, %v232
    %234 = vmatmul.f32.gmra.mxu0 %v92
    %v235 = vpop.f32.mrf.mxu0
    %v236 = vadd.f32 %v180, %v235
    %237 = vmatmul.f32.gmra.mxu0 %v93
    %v238 = vpop.f32.mrf.mxu0
    %v239 = vadd.f32 %v180, %v238
    %240 = vmatmul.f32.gmra.mxu0 %v94
    %v241 = vpop.f32.mrf.mxu0
    %v242 = vadd.f32 %v180, %v241
    %243 = vmatmul.f32.gmra.mxu0 %v95
    %v244 = vpop.f32.mrf.mxu0
    %v245 = vadd.f32 %v180, %v244
    %246 = vmatmul.f32.gmra.mxu0 %v96
    %v247 = vpop.f32.mrf.mxu0
    %v248 = vadd.f32 %v180, %v247
    %249 = vmatmul.f32.gmra.mxu0 %v97
    %v250 = vpop.f32.mrf.mxu0
    %v251 = vadd.f32 %v180, %v250
    %252 = vmatmul.f32.gmra.mxu0 %v98
    %v253 = vpop.f32.mrf.mxu0
    %v254 = vadd.f32 %v180, %v253
    %255 = vmatmul.f32.gmra.mxu0 %v99
    %v256 = vpop.f32.mrf.mxu0
    %v257 = vadd.f32 %v180, %v256
    %258 = vmatmul.f32.gmra.mxu0 %v100
    %v259 = vpop.f32.mrf.mxu0
    %v260 = vadd.f32 %v180, %v259
    %261 = vmatmul.f32.gmra.mxu0 %v101
    %v262 = vpop.f32.mrf.mxu0
    %v263 = vadd.f32 %v180, %v262
    %264 = vmatmul.f32.gmra.mxu0 %v102
    %v265 = vpop.f32.mrf.mxu0
    %v266 = vadd.f32 %v180, %v265
    %267 = vmatmul.f32.gmra.mxu0 %v103
    %v268 = vpop.f32.mrf.mxu0
    %v269 = vadd.f32 %v180, %v268
    %270 = vmatmul.f32.gmra.mxu0 %v104
    %v271 = vpop.f32.mrf.mxu0
    %v272 = vadd.f32 %v180, %v271
    %273 = vmatmul.f32.gmra.mxu0 %v105
    %v274 = vpop.f32.mrf.mxu0
    %v275 = vadd.f32 %v180, %v274
    %276 = vmatmul.f32.gmra.mxu0 %v106
    %v277 = vpop.f32.mrf.mxu0
    %v278 = vadd.f32 %v180, %v277
    %279 = vmatmul.f32.gmra.mxu0 %v107
    %v280 = vpop.f32.mrf.mxu0
    %v281 = vadd.f32 %v180, %v280
    %282 = vmatmul.f32.gmra.mxu0 %v108
    %v283 = vpop.f32.mrf.mxu0
    %v284 = vadd.f32 %v180, %v283
    %285 = vmatmul.f32.gmra.mxu0 %v109
    %v286 = vpop.f32.mrf.mxu0
    %v287 = vadd.f32 %v180, %v286
    %288 = vmatmul.f32.gmra.mxu0 %v110
    %v289 = vpop.f32.mrf.mxu0
    %v290 = vadd.f32 %v180, %v289
    %291 = vmatmul.f32.gmra.mxu0 %v111
    %v292 = vpop.f32.mrf.mxu0
    %v293 = vadd.f32 %v180, %v292
    %294 = vmatmul.f32.gmra.mxu0 %v112
    %v295 = vpop.f32.mrf.mxu0
    %v296 = vadd.f32 %v180, %v295
    %297 = vmatmul.f32.gmra.mxu0 %v113
    %v298 = vpop.f32.mrf.mxu0
    %v299 = vadd.f32 %v180, %v298
    %300 = vdwg.mxu0
    %301 = vmatpush.msra.mxu0 %v175
    %302 = vmatpush.msra.mxu0 %v171
    %303 = vmatpush.msra.mxu0 %v167
    %304 = vmatpush.msra.mxu0 %v163
    %305 = vmatpush.msra.mxu0 %v159
    %306 = vmatpush.msra.mxu0 %v155
    %307 = vmatpush.msra.mxu0 %v151
    %308 = vmatpush.msra.mxu0 %v147
    %309 = vmatpush.msra.mxu0 %v143
    %310 = vmatpush.msra.mxu0 %v139
    %311 = vmatpush.msra.mxu0 %v135
    %312 = vmatpush.msra.mxu0 %v131
    %313 = vmatpush.msra.mxu0 %v127
    %314 = vmatpush.msra.mxu0 %v123
    %315 = vmatpush.msra.mxu0 %v119
    %316 = vmatpush.msra.mxu0 %v115
    %317 = vmatmul.f32.gmra.mxu0 %v82
    %v318 = vpop.f32.mrf.mxu0
    %v319 = vadd.f32 %v181, %v318
    %320 = vmatmul.f32.gmra.mxu0 %v83
    %v321 = vpop.f32.mrf.mxu0
    %v322 = vadd.f32 %v181, %v321
    %323 = vmatmul.f32.gmra.mxu0 %v84
    %v324 = vpop.f32.mrf.mxu0
    %v325 = vadd.f32 %v181, %v324
    %326 = vmatmul.f32.gmra.mxu0 %v85
    %v327 = vpop.f32.mrf.mxu0
    %v328 = vadd.f32 %v181, %v327
    %329 = vmatmul.f32.gmra.mxu0 %v86
    %v330 = vpop.f32.mrf.mxu0
    %v331 = vadd.f32 %v181, %v330
    %332 = vmatmul.f32.gmra.mxu0 %v87
    %v333 = vpop.f32.mrf.mxu0
    %v334 = vadd.f32 %v181, %v333
    %335 = vmatmul.f32.gmra.mxu0 %v88
    %v336 = vpop.f32.mrf.mxu0
    %v337 = vadd.f32 %v181, %v336
    %338 = vmatmul.f32.gmra.mxu0 %v89
    %v339 = vpop.f32.mrf.mxu0
    %v340 = vadd.f32 %v181, %v339
    %341 = vmatmul.f32.gmra.mxu0 %v90
    %v342 = vpop.f32.mrf.mxu0
    %v343 = vadd.f32 %v181, %v342
    %344 = vmatmul.f32.gmra.mxu0 %v91
    %v345 = vpop.f32.mrf.mxu0
    %v346 = vadd.f32 %v181, %v345
    %347 = vmatmul.f32.gmra.mxu0 %v92
    %v348 = vpop.f32.mrf.mxu0
    %v349 = vadd.f32 %v181, %v348
    %350 = vmatmul.f32.gmra.mxu0 %v93
    %v351 = vpop.f32.mrf.mxu0
    %v352 = vadd.f32 %v181, %v351
    %353 = vmatmul.f32.gmra.mxu0 %v94
    %v354 = vpop.f32.mrf.mxu0
    %v355 = vadd.f32 %v181, %v354
    %356 = vmatmul.f32.gmra.mxu0 %v95
    %v357 = vpop.f32.mrf.mxu0
    %v358 = vadd.f32 %v181, %v357
    %359 = vmatmul.f32.gmra.mxu0 %v96
    %v360 = vpop.f32.mrf.mxu0
    %v361 = vadd.f32 %v181, %v360
    %362 = vmatmul.f32.gmra.mxu0 %v97
    %v363 = vpop.f32.mrf.mxu0
    %v364 = vadd.f32 %v181, %v363
    %365 = vmatmul.f32.gmra.mxu0 %v98
    %v366 = vpop.f32.mrf.mxu0
    %v367 = vadd.f32 %v181, %v366
    %368 = vmatmul.f32.gmra.mxu0 %v99
    %v369 = vpop.f32.mrf.mxu0
    %v370 = vadd.f32 %v181, %v369
    %371 = vmatmul.f32.gmra.mxu0 %v100
    %v372 = vpop.f32.mrf.mxu0
    %v373 = vadd.f32 %v181, %v372
    %374 = vmatmul.f32.gmra.mxu0 %v101
    %v375 = vpop.f32.mrf.mxu0
    %v376 = vadd.f32 %v181, %v375
    %377 = vmatmul.f32.gmra.mxu0 %v102
    %v378 = vpop.f32.mrf.mxu0
    %v379 = vadd.f32 %v181, %v378
    %380 = vmatmul.f32.gmra.mxu0 %v103
    %v381 = vpop.f32.mrf.mxu0
    %v382 = vadd.f32 %v181, %v381
    %383 = vmatmul.f32.gmra.mxu0 %v104
    %v384 = vpop.f32.mrf.mxu0
    %v385 = vadd.f32 %v181, %v384
    %386 = vmatmul.f32.gmra.mxu0 %v105
    %v387 = vpop.f32.mrf.mxu0
    %v388 = vadd.f32 %v181, %v387
    %389 = vmatmul.f32.gmra.mxu0 %v106
    %v390 = vpop.f32.mrf.mxu0
    %v391 = vadd.f32 %v181, %v390
    %392 = vmatmul.f32.gmra.mxu0 %v107
    %v393 = vpop.f32.mrf.mxu0
    %v394 = vadd.f32 %v181, %v393
    %395 = vmatmul.f32.gmra.mxu0 %v108
    %v396 = vpop.f32.mrf.mxu0
    %v397 = vadd.f32 %v181, %v396
    %398 = vmatmul.f32.gmra.mxu0 %v109
    %v399 = vpop.f32.mrf.mxu0
    %v400 = vadd.f32 %v181, %v399
    %401 = vmatmul.f32.gmra.mxu0 %v110
    %v402 = vpop.f32.mrf.mxu0
    %v403 = vadd.f32 %v181, %v402
    %404 = vmatmul.f32.gmra.mxu0 %v111
    %v405 = vpop.f32.mrf.mxu0
    %v406 = vadd.f32 %v181, %v405
    %407 = vmatmul.f32.gmra.mxu0 %v112
    %v408 = vpop.f32.mrf.mxu0
    %v409 = vadd.f32 %v181, %v408
    %410 = vmatmul.f32.gmra.mxu0 %v113
    %v411 = vpop.f32.mrf.mxu0
    %v412 = vadd.f32 %v181, %v411
    %413 = vdwg.mxu0
    %414 = vmatpush.msra.mxu0 %v176
    %415 = vmatpush.msra.mxu0 %v172
    %416 = vmatpush.msra.mxu0 %v168
    %417 = vmatpush.msra.mxu0 %v164
    %418 = vmatpush.msra.mxu0 %v160
    %419 = vmatpush.msra.mxu0 %v156
    %420 = vmatpush.msra.mxu0 %v152
    %421 = vmatpush.msra.mxu0 %v148
    %422 = vmatpush.msra.mxu0 %v144
    %423 = vmatpush.msra.mxu0 %v140
    %424 = vmatpush.msra.mxu0 %v136
    %425 = vmatpush.msra.mxu0 %v132
    %426 = vmatpush.msra.mxu0 %v128
    %427 = vmatpush.msra.mxu0 %v124
    %428 = vmatpush.msra.mxu0 %v120
    %429 = vmatpush.msra.mxu0 %v116
    %430 = vmatmul.f32.gmra.mxu0 %v82
    %v431 = vpop.f32.mrf.mxu0
    %v432 = vadd.f32 %v182, %v431
    %433 = vmatmul.f32.gmra.mxu0 %v83
    %v434 = vpop.f32.mrf.mxu0
    %v435 = vadd.f32 %v182, %v434
    %436 = vmatmul.f32.gmra.mxu0 %v84
    %v437 = vpop.f32.mrf.mxu0
    %v438 = vadd.f32 %v182, %v437
    %439 = vmatmul.f32.gmra.mxu0 %v85
    %v440 = vpop.f32.mrf.mxu0
    %v441 = vadd.f32 %v182, %v440
    %442 = vmatmul.f32.gmra.mxu0 %v86
    %v443 = vpop.f32.mrf.mxu0
    %v444 = vadd.f32 %v182, %v443
    %445 = vmatmul.f32.gmra.mxu0 %v87
    %v446 = vpop.f32.mrf.mxu0
    %v447 = vadd.f32 %v182, %v446
    %448 = vmatmul.f32.gmra.mxu0 %v88
    %v449 = vpop.f32.mrf.mxu0
    %v450 = vadd.f32 %v182, %v449
    %451 = vmatmul.f32.gmra.mxu0 %v89
    %v452 = vpop.f32.mrf.mxu0
    %v453 = vadd.f32 %v182, %v452
    %454 = vmatmul.f32.gmra.mxu0 %v90
    %v455 = vpop.f32.mrf.mxu0
    %v456 = vadd.f32 %v182, %v455
    %457 = vmatmul.f32.gmra.mxu0 %v91
    %v458 = vpop.f32.mrf.mxu0
    %v459 = vadd.f32 %v182, %v458
    %460 = vmatmul.f32.gmra.mxu0 %v92
    %v461 = vpop.f32.mrf.mxu0
    %v462 = vadd.f32 %v182, %v461
    %463 = vmatmul.f32.gmra.mxu0 %v93
    %v464 = vpop.f32.mrf.mxu0
    %v465 = vadd.f32 %v182, %v464
    %466 = vmatmul.f32.gmra.mxu0 %v94
    %v467 = vpop.f32.mrf.mxu0
    %v468 = vadd.f32 %v182, %v467
    %469 = vmatmul.f32.gmra.mxu0 %v95
    %v470 = vpop.f32.mrf.mxu0
    %v471 = vadd.f32 %v182, %v470
    %472 = vmatmul.f32.gmra.mxu0 %v96
    %v473 = vpop.f32.mrf.mxu0
    %v474 = vadd.f32 %v182, %v473
    %475 = vmatmul.f32.gmra.mxu0 %v97
    %v476 = vpop.f32.mrf.mxu0
    %v477 = vadd.f32 %v182, %v476
    %478 = vmatmul.f32.gmra.mxu0 %v98
    %v479 = vpop.f32.mrf.mxu0
    %v480 = vadd.f32 %v182, %v479
    %481 = vmatmul.f32.gmra.mxu0 %v99
    %v482 = vpop.f32.mrf.mxu0
    %v483 = vadd.f32 %v182, %v482
    %484 = vmatmul.f32.gmra.mxu0 %v100
    %v485 = vpop.f32.mrf.mxu0
    %v486 = vadd.f32 %v182, %v485
    %487 = vmatmul.f32.gmra.mxu0 %v101
    %v488 = vpop.f32.mrf.mxu0
    %v489 = vadd.f32 %v182, %v488
    %490 = vmatmul.f32.gmra.mxu0 %v102
    %v491 = vpop.f32.mrf.mxu0
    %v492 = vadd.f32 %v182, %v491
    %493 = vmatmul.f32.gmra.mxu0 %v103
    %v494 = vpop.f32.mrf.mxu0
    %v495 = vadd.f32 %v182, %v494
    %496 = vmatmul.f32.gmra.mxu0 %v104
    %v497 = vpop.f32.mrf.mxu0
    %v498 = vadd.f32 %v182, %v497
    %499 = vmatmul.f32.gmra.mxu0 %v105
    %v500 = vpop.f32.mrf.mxu0
    %v501 = vadd.f32 %v182, %v500
    %502 = vmatmul.f32.gmra.mxu0 %v106
    %v503 = vpop.f32.mrf.mxu0
    %v504 = vadd.f32 %v182, %v503
    %505 = vmatmul.f32.gmra.mxu0 %v107
    %v506 = vpop.f32.mrf.mxu0
    %v507 = vadd.f32 %v182, %v506
    %508 = vmatmul.f32.gmra.mxu0 %v108
    %v509 = vpop.f32.mrf.mxu0
    %v510 = vadd.f32 %v182, %v509
    %511 = vmatmul.f32.gmra.mxu0 %v109
    %v512 = vpop.f32.mrf.mxu0
    %v513 = vadd.f32 %v182, %v512
    %514 = vmatmul.f32.gmra.mxu0 %v110
    %v515 = vpop.f32.mrf.mxu0
    %v516 = vadd.f32 %v182, %v515
    %517 = vmatmul.f32.gmra.mxu0 %v111
    %v518 = vpop.f32.mrf.mxu0
    %v519 = vadd.f32 %v182, %v518
    %520 = vmatmul.f32.gmra.mxu0 %v112
    %v521 = vpop.f32.mrf.mxu0
    %v522 = vadd.f32 %v182, %v521
    %523 = vmatmul.f32.gmra.mxu0 %v113
    %v524 = vpop.f32.mrf.mxu0
    %v525 = vadd.f32 %v182, %v524
    %526 = vdwg.mxu0
    %527 = vmatpush.msra.mxu0 %v177
    %528 = vmatpush.msra.mxu0 %v173
    %529 = vmatpush.msra.mxu0 %v169
    %530 = vmatpush.msra.mxu0 %v165
    %531 = vmatpush.msra.mxu0 %v161
    %532 = vmatpush.msra.mxu0 %v157
    %533 = vmatpush.msra.mxu0 %v153
    %534 = vmatpush.msra.mxu0 %v149
    %535 = vmatpush.msra.mxu0 %v145
    %536 = vmatpush.msra.mxu0 %v141
    %537 = vmatpush.msra.mxu0 %v137
    %538 = vmatpush.msra.mxu0 %v133
    %539 = vmatpush.msra.mxu0 %v129
    %540 = vmatpush.msra.mxu0 %v125
    %541 = vmatpush.msra.mxu0 %v121
    %542 = vmatpush.msra.mxu0 %v117
    %543 = vmatmul.f32.gmra.mxu0 %v82
    %v544 = vpop.f32.mrf.mxu0
    %v545 = vadd.f32 %v183, %v544
    %546 = vmatmul.f32.gmra.mxu0 %v83
    %v547 = vpop.f32.mrf.mxu0
    %v548 = vadd.f32 %v183, %v547
    %549 = vmatmul.f32.gmra.mxu0 %v84
    %v550 = vpop.f32.mrf.mxu0
    %v551 = vadd.f32 %v183, %v550
    %552 = vmatmul.f32.gmra.mxu0 %v85
    %v553 = vpop.f32.mrf.mxu0
    %v554 = vadd.f32 %v183, %v553
    %555 = vmatmul.f32.gmra.mxu0 %v86
    %v556 = vpop.f32.mrf.mxu0
    %v557 = vadd.f32 %v183, %v556
    %558 = vmatmul.f32.gmra.mxu0 %v87
    %v559 = vpop.f32.mrf.mxu0
    %v560 = vadd.f32 %v183, %v559
    %561 = vmatmul.f32.gmra.mxu0 %v88
    %v562 = vpop.f32.mrf.mxu0
    %v563 = vadd.f32 %v183, %v562
    %564 = vmatmul.f32.gmra.mxu0 %v89
    %v565 = vpop.f32.mrf.mxu0
    %v566 = vadd.f32 %v183, %v565
    %567 = vmatmul.f32.gmra.mxu0 %v90
    %v568 = vpop.f32.mrf.mxu0
    %v569 = vadd.f32 %v183, %v568
    %570 = vmatmul.f32.gmra.mxu0 %v91
    %v571 = vpop.f32.mrf.mxu0
    %v572 = vadd.f32 %v183, %v571
    %573 = vmatmul.f32.gmra.mxu0 %v92
    %v574 = vpop.f32.mrf.mxu0
    %v575 = vadd.f32 %v183, %v574
    %576 = vmatmul.f32.gmra.mxu0 %v93
    %v577 = vpop.f32.mrf.mxu0
    %v578 = vadd.f32 %v183, %v577
    %579 = vmatmul.f32.gmra.mxu0 %v94
    %v580 = vpop.f32.mrf.mxu0
    %v581 = vadd.f32 %v183, %v580
    %582 = vmatmul.f32.gmra.mxu0 %v95
    %v583 = vpop.f32.mrf.mxu0
    %v584 = vadd.f32 %v183, %v583
    %585 = vmatmul.f32.gmra.mxu0 %v96
    %v586 = vpop.f32.mrf.mxu0
    %v587 = vadd.f32 %v183, %v586
    %588 = vmatmul.f32.gmra.mxu0 %v97
    %v589 = vpop.f32.mrf.mxu0
    %v590 = vadd.f32 %v183, %v589
    %591 = vmatmul.f32.gmra.mxu0 %v98
    %v592 = vpop.f32.mrf.mxu0
    %v593 = vadd.f32 %v183, %v592
    %594 = vmatmul.f32.gmra.mxu0 %v99
    %v595 = vpop.f32.mrf.mxu0
    %v596 = vadd.f32 %v183, %v595
    %597 = vmatmul.f32.gmra.mxu0 %v100
    %v598 = vpop.f32.mrf.mxu0
    %v599 = vadd.f32 %v183, %v598
    %600 = vmatmul.f32.gmra.mxu0 %v101
    %v601 = vpop.f32.mrf.mxu0
    %v602 = vadd.f32 %v183, %v601
    %603 = vmatmul.f32.gmra.mxu0 %v102
    %v604 = vpop.f32.mrf.mxu0
    %v605 = vadd.f32 %v183, %v604
    %606 = vmatmul.f32.gmra.mxu0 %v103
    %v607 = vpop.f32.mrf.mxu0
    %v608 = vadd.f32 %v183, %v607
    %609 = vmatmul.f32.gmra.mxu0 %v104
    %v610 = vpop.f32.mrf.mxu0
    %v611 = vadd.f32 %v183, %v610
    %612 = vmatmul.f32.gmra.mxu0 %v105
    %v613 = vpop.f32.mrf.mxu0
    %v614 = vadd.f32 %v183, %v613
    %615 = vmatmul.f32.gmra.mxu0 %v106
    %v616 = vpop.f32.mrf.mxu0
    %v617 = vadd.f32 %v183, %v616
    %618 = vmatmul.f32.gmra.mxu0 %v107
    %v619 = vpop.f32.mrf.mxu0
    %v620 = vadd.f32 %v183, %v619
    %621 = vmatmul.f32.gmra.mxu0 %v108
    %v622 = vpop.f32.mrf.mxu0
    %v623 = vadd.f32 %v183, %v622
    %624 = vmatmul.f32.gmra.mxu0 %v109
    %v625 = vpop.f32.mrf.mxu0
    %v626 = vadd.f32 %v183, %v625
    %627 = vmatmul.f32.gmra.mxu0 %v110
    %v628 = vpop.f32.mrf.mxu0
    %v629 = vadd.f32 %v183, %v628
    %630 = vmatmul.f32.gmra.mxu0 %v111
    %v631 = vpop.f32.mrf.mxu0
    %v632 = vadd.f32 %v183, %v631
    %633 = vmatmul.f32.gmra.mxu0 %v112
    %v634 = vpop.f32.mrf.mxu0
    %v635 = vadd.f32 %v183, %v634
    %636 = vmatmul.f32.gmra.mxu0 %v113
    %v637 = vpop.f32.mrf.mxu0
    %v638 = vadd.f32 %v183, %v637
    %639 = vdwg.mxu0
    %v640 = vmax.f32 %v206, 0.0
    %v641 = vmax.f32 %v319, 0.0
    %v642 = vmax.f32 %v432, 0.0
    %v643 = vmax.f32 %v545, 0.0
    %v644 = vmax.f32 %v209, 0.0
    %v645 = vmax.f32 %v322, 0.0
    %v646 = vmax.f32 %v435, 0.0
    %v647 = vmax.f32 %v548, 0.0
    %v648 = vmax.f32 %v212, 0.0
    %v649 = vmax.f32 %v325, 0.0
    %v650 = vmax.f32 %v438, 0.0
    %v651 = vmax.f32 %v551, 0.0
    %v652 = vmax.f32 %v215, 0.0
    %v653 = vmax.f32 %v328, 0.0
    %v654 = vmax.f32 %v441, 0.0
    %v655 = vmax.f32 %v554, 0.0
    %v656 = vmax.f32 %v218, 0.0
    %v657 = vmax.f32 %v331, 0.0
    %v658 = vmax.f32 %v444, 0.0
    %v659 = vmax.f32 %v557, 0.0
    %v660 = vmax.f32 %v221, 0.0
    %v661 = vmax.f32 %v334, 0.0
    %v662 = vmax.f32 %v447, 0.0
    %v663 = vmax.f32 %v560, 0.0
    %v664 = vmax.f32 %v224, 0.0
    %v665 = vmax.f32 %v337, 0.0
    %v666 = vmax.f32 %v450, 0.0
    %v667 = vmax.f32 %v563, 0.0
    %v668 = vmax.f32 %v227, 0.0
    %v669 = vmax.f32 %v340, 0.0
    %v670 = vmax.f32 %v453, 0.0
    %v671 = vmax.f32 %v566, 0.0
    %v672 = vmax.f32 %v230, 0.0
    %v673 = vmax.f32 %v343, 0.0
    %v674 = vmax.f32 %v456, 0.0
    %v675 = vmax.f32 %v569, 0.0
    %v676 = vmax.f32 %v233, 0.0
    %v677 = vmax.f32 %v346, 0.0
    %v678 = vmax.f32 %v459, 0.0
    %v679 = vmax.f32 %v572, 0.0
    %v680 = vmax.f32 %v236, 0.0
    %v681 = vmax.f32 %v349, 0.0
    %v682 = vmax.f32 %v462, 0.0
    %v683 = vmax.f32 %v575, 0.0
    %v684 = vmax.f32 %v239, 0.0
    %v685 = vmax.f32 %v352, 0.0
    %v686 = vmax.f32 %v465, 0.0
    %v687 = vmax.f32 %v578, 0.0
    %v688 = vmax.f32 %v242, 0.0
    %v689 = vmax.f32 %v355, 0.0
    %v690 = vmax.f32 %v468, 0.0
    %v691 = vmax.f32 %v581, 0.0
    %v692 = vmax.f32 %v245, 0.0
    %v693 = vmax.f32 %v358, 0.0
    %v694 = vmax.f32 %v471, 0.0
    %v695 = vmax.f32 %v584, 0.0
    %v696 = vmax.f32 %v248, 0.0
    %v697 = vmax.f32 %v361, 0.0
    %v698 = vmax.f32 %v474, 0.0
    %v699 = vmax.f32 %v587, 0.0
    %v700 = vmax.f32 %v251, 0.0
    %v701 = vmax.f32 %v364, 0.0
    %v702 = vmax.f32 %v477, 0.0
    %v703 = vmax.f32 %v590, 0.0
    %v704 = vmax.f32 %v254, 0.0
    %v705 = vmax.f32 %v367, 0.0
    %v706 = vmax.f32 %v480, 0.0
    %v707 = vmax.f32 %v593, 0.0
    %v708 = vmax.f32 %v257, 0.0
    %v709 = vmax.f32 %v370, 0.0
    %v710 = vmax.f32 %v483, 0.0
    %v711 = vmax.f32 %v596, 0.0
    %v712 = vmax.f32 %v260, 0.0
    %v713 = vmax.f32 %v373, 0.0
    %v714 = vmax.f32 %v486, 0.0
    %v715 = vmax.f32 %v599, 0.0
    %v716 = vmax.f32 %v263, 0.0
    %v717 = vmax.f32 %v376, 0.0
    %v718 = vmax.f32 %v489, 0.0
    %v719 = vmax.f32 %v602, 0.0
    %v720 = vmax.f32 %v266, 0.0
    %v721 = vmax.f32 %v379, 0.0
    %v722 = vmax.f32 %v492, 0.0
    %v723 = vmax.f32 %v605, 0.0
    %v724 = vmax.f32 %v269, 0.0
    %v725 = vmax.f32 %v382, 0.0
    %v726 = vmax.f32 %v495, 0.0
    %v727 = vmax.f32 %v608, 0.0
    %v728 = vmax.f32 %v272, 0.0
    %v729 = vmax.f32 %v385, 0.0
    %v730 = vmax.f32 %v498, 0.0
    %v731 = vmax.f32 %v611, 0.0
    %v732 = vmax.f32 %v275, 0.0
    %v733 = vmax.f32 %v388, 0.0
    %v734 = vmax.f32 %v501, 0.0
    %v735 = vmax.f32 %v614, 0.0
    %v736 = vmax.f32 %v278, 0.0
    %v737 = vmax.f32 %v391, 0.0
    %v738 = vmax.f32 %v504, 0.0
    %v739 = vmax.f32 %v617, 0.0
    %v740 = vmax.f32 %v281, 0.0
    %v741 = vmax.f32 %v394, 0.0
    %v742 = vmax.f32 %v507, 0.0
    %v743 = vmax.f32 %v620, 0.0
    %v744 = vmax.f32 %v284, 0.0
    %v745 = vmax.f32 %v397, 0.0
    %v746 = vmax.f32 %v510, 0.0
    %v747 = vmax.f32 %v623, 0.0
    %v748 = vmax.f32 %v287, 0.0
    %v749 = vmax.f32 %v400, 0.0
    %v750 = vmax.f32 %v513, 0.0
    %v751 = vmax.f32 %v626, 0.0
    %v752 = vmax.f32 %v290, 0.0
    %v753 = vmax.f32 %v403, 0.0
    %v754 = vmax.f32 %v516, 0.0
    %v755 = vmax.f32 %v629, 0.0
    %v756 = vmax.f32 %v293, 0.0
    %v757 = vmax.f32 %v406, 0.0
    %v758 = vmax.f32 %v519, 0.0
    %v759 = vmax.f32 %v632, 0.0
    %v760 = vmax.f32 %v296, 0.0
    %v761 = vmax.f32 %v409, 0.0
    %v762 = vmax.f32 %v522, 0.0
    %v763 = vmax.f32 %v635, 0.0
    %v764 = vmax.f32 %v299, 0.0
    %v765 = vmax.f32 %v412, 0.0
    %v766 = vmax.f32 %v525, 0.0
    %v767 = vmax.f32 %v638, 0.0
    %v768 = vld [vmem:[#allocation8] sm:$0xff]
    %v769 = vld [vmem:[#allocation8 + $0x8] sm:$0xff]
    %v770 = vld [vmem:[#allocation8 + $0x10] sm:$0xff]
    %v771 = vld [vmem:[#allocation8 + $0x18] sm:$0xff]
    %v772 = vld [vmem:[#allocation8 + $0x20] sm:$0xff]
    %v773 = vld [vmem:[#allocation8 + $0x28] sm:$0xff]
    %v774 = vld [vmem:[#allocation8 + $0x30] sm:$0xff]
    %v775 = vld [vmem:[#allocation8 + $0x38] sm:$0xff]
    %v776 = vld [vmem:[#allocation8 + $0x40] sm:$0xff]
    %v777 = vld [vmem:[#allocation8 + $0x48] sm:$0xff]
    %v778 = vld [vmem:[#allocation8 + $0x50] sm:$0xff]
    %v779 = vld [vmem:[#allocation8 + $0x58] sm:$0xff]
    %v780 = vld [vmem:[#allocation8 + $0x60] sm:$0xff]
    %v781 = vld [vmem:[#allocation8 + $0x68] sm:$0xff]
    %v782 = vld [vmem:[#allocation8 + $0x70] sm:$0xff]
    %v783 = vld [vmem:[#allocation8 + $0x78] sm:$0xff]
    %v784 = vld [vmem:[#allocation8 + $0x80] sm:$0xff]
    %v785 = vld [vmem:[#allocation8 + $0x88] sm:$0xff]
    %v786 = vld [vmem:[#allocation8 + $0x90] sm:$0xff]
    %v787 = vld [vmem:[#allocation8 + $0x98] sm:$0xff]
    %v788 = vld [vmem:[#allocation8 + $0xa0] sm:$0xff]
    %v789 = vld [vmem:[#allocation8 + $0xa8] sm:$0xff]
    %v790 = vld [vmem:[#allocation8 + $0xb0] sm:$0xff]
    %v791 = vld [vmem:[#allocation8 + $0xb8] sm:$0xff]
    %v792 = vld [vmem:[#allocation8 + $0xc0] sm:$0xff]
    %v793 = vld [vmem:[#allocation8 + $0xc8] sm:$0xff]
    %v794 = vld [vmem:[#allocation8 + $0xd0] sm:$0xff]
    %v795 = vld [vmem:[#allocation8 + $0xd8] sm:$0xff]
    %v796 = vld [vmem:[#allocation8 + $0xe0] sm:$0xff]
    %v797 = vld [vmem:[#allocation8 + $0xe8] sm:$0xff]
    %v798 = vld [vmem:[#allocation8 + $0xf0] sm:$0xff]
    %v799 = vld [vmem:[#allocation8 + $0xf8] sm:$0xff]
    %v800 = vld [vmem:[#allocation8 + $0x100] sm:$0xff]
    %v801 = vld [vmem:[#allocation8 + $0x108] sm:$0xff]
    %v802 = vld [vmem:[#allocation8 + $0x110] sm:$0xff]
    %v803 = vld [vmem:[#allocation8 + $0x118] sm:$0xff]
    %v804 = vld [vmem:[#allocation8 + $0x120] sm:$0xff]
    %v805 = vld [vmem:[#allocation8 + $0x128] sm:$0xff]
    %v806 = vld [vmem:[#allocation8 + $0x130] sm:$0xff]
    %v807 = vld [vmem:[#allocation8 + $0x138] sm:$0xff]
    %v808 = vld [vmem:[#allocation8 + $0x140] sm:$0xff]
    %v809 = vld [vmem:[#allocation8 + $0x148] sm:$0xff]
    %v810 = vld [vmem:[#allocation8 + $0x150] sm:$0xff]
    %v811 = vld [vmem:[#allocation8 + $0x158] sm:$0xff]
    %v812 = vld [vmem:[#allocation8 + $0x160] sm:$0xff]
    %v813 = vld [vmem:[#allocation8 + $0x168] sm:$0xff]
    %v814 = vld [vmem:[#allocation8 + $0x170] sm:$0xff]
    %v815 = vld [vmem:[#allocation8 + $0x178] sm:$0xff]
    %v816 = vld [vmem:[#allocation8 + $0x180] sm:$0xff]
    %v817 = vld [vmem:[#allocation8 + $0x188] sm:$0xff]
    %v818 = vld [vmem:[#allocation8 + $0x190] sm:$0xff]
    %v819 = vld [vmem:[#allocation8 + $0x198] sm:$0xff]
    %v820 = vld [vmem:[#allocation8 + $0x1a0] sm:$0xff]
    %v821 = vld [vmem:[#allocation8 + $0x1a8] sm:$0xff]
    %v822 = vld [vmem:[#allocation8 + $0x1b0] sm:$0xff]
    %v823 = vld [vmem:[#allocation8 + $0x1b8] sm:$0xff]
    %v824 = vld [vmem:[#allocation8 + $0x1c0] sm:$0xff]
    %v825 = vld [vmem:[#allocation8 + $0x1c8] sm:$0xff]
    %v826 = vld [vmem:[#allocation8 + $0x1d0] sm:$0xff]
    %v827 = vld [vmem:[#allocation8 + $0x1d8] sm:$0xff]
    %v828 = vld [vmem:[#allocation8 + $0x1e0] sm:$0xff]
    %v829 = vld [vmem:[#allocation8 + $0x1e8] sm:$0xff]
    %v830 = vld [vmem:[#allocation8 + $0x1f0] sm:$0xff]
    %v831 = vld [vmem:[#allocation8 + $0x1f8] sm:$0xff]
    %v832 = vld [vmem:[%s4] sm:$0x1]
    %v834 = vperm.slane %v832, 0
    %836 = vmatpush.msra.mxu0 %v783
    %837 = vmatpush.msra.mxu0 %v782
    %838 = vmatpush.msra.mxu0 %v781
    %839 = vmatpush.msra.mxu0 %v780
    %840 = vmatpush.msra.mxu0 %v779
    %841 = vmatpush.msra.mxu0 %v778
    %842 = vmatpush.msra.mxu0 %v777
    %843 = vmatpush.msra.mxu0 %v776
    %844 = vmatpush.msra.mxu0 %v775
    %845 = vmatpush.msra.mxu0 %v774
    %846 = vmatpush.msra.mxu0 %v773
    %847 = vmatpush.msra.mxu0 %v772
    %848 = vmatpush.msra.mxu0 %v771
    %849 = vmatpush.msra.mxu0 %v770
    %850 = vmatpush.msra.mxu0 %v769
    %851 = vmatpush.msra.mxu0 %v768
    %852 = vmatmul.f32.gmra.mxu0 %v640
    %v853 = vpop.f32.mrf.mxu0
    %v854 = vadd.f32 %v834, %v853
    %855 = vmatmul.f32.gmra.mxu0 %v644
    %v856 = vpop.f32.mrf.mxu0
    %v857 = vadd.f32 %v834, %v856
    %858 = vmatmul.f32.gmra.mxu0 %v648
    %v859 = vpop.f32.mrf.mxu0
    %v860 = vadd.f32 %v834, %v859
    %861 = vmatmul.f32.gmra.mxu0 %v652
    %v862 = vpop.f32.mrf.mxu0
    %v863 = vadd.f32 %v834, %v862
    %864 = vmatmul.f32.gmra.mxu0 %v656
    %v865 = vpop.f32.mrf.mxu0
    %v866 = vadd.f32 %v834, %v865
    %867 = vmatmul.f32.gmra.mxu0 %v660
    %v868 = vpop.f32.mrf.mxu0
    %v869 = vadd.f32 %v834, %v868
    %870 = vmatmul.f32.gmra.mxu0 %v664
    %v871 = vpop.f32.mrf.mxu0
    %v872 = vadd.f32 %v834, %v871
    %873 = vmatmul.f32.gmra.mxu0 %v668
    %v874 = vpop.f32.mrf.mxu0
    %v875 = vadd.f32 %v834, %v874
    %876 = vmatmul.f32.gmra.mxu0 %v672
    %v877 = vpop.f32.mrf.mxu0
    %v878 = vadd.f32 %v834, %v877
    %879 = vmatmul.f32.gmra.mxu0 %v676
    %v880 = vpop.f32.mrf.mxu0
    %v881 = vadd.f32 %v834, %v880
    %882 = vmatmul.f32.gmra.mxu0 %v680
    %v883 = vpop.f32.mrf.mxu0
    %v884 = vadd.f32 %v834, %v883
    %885 = vmatmul.f32.gmra.mxu0 %v684
    %v886 = vpop.f32.mrf.mxu0
    %v887 = vadd.f32 %v834, %v886
    %888 = vmatmul.f32.gmra.mxu0 %v688
    %v889 = vpop.f32.mrf.mxu0
    %v890 = vadd.f32 %v834, %v889
    %891 = vmatmul.f32.gmra.mxu0 %v692
    %v892 = vpop.f32.mrf.mxu0
    %v893 = vadd.f32 %v834, %v892
    %894 = vmatmul.f32.gmra.mxu0 %v696
    %v895 = vpop.f32.mrf.mxu0
    %v896 = vadd.f32 %v834, %v895
    %897 = vmatmul.f32.gmra.mxu0 %v700
    %v898 = vpop.f32.mrf.mxu0
    %v899 = vadd.f32 %v834, %v898
    %900 = vmatmul.f32.gmra.mxu0 %v704
    %v901 = vpop.f32.mrf.mxu0
    %v902 = vadd.f32 %v834, %v901
    %903 = vmatmul.f32.gmra.mxu0 %v708
    %v904 = vpop.f32.mrf.mxu0
    %v905 = vadd.f32 %v834, %v904
    %906 = vmatmul.f32.gmra.mxu0 %v712
    %v907 = vpop.f32.mrf.mxu0
    %v908 = vadd.f32 %v834, %v907
    %909 = vmatmul.f32.gmra.mxu0 %v716
    %v910 = vpop.f32.mrf.mxu0
    %v911 = vadd.f32 %v834, %v910
    %912 = vmatmul.f32.gmra.mxu0 %v720
    %v913 = vpop.f32.mrf.mxu0
    %v914 = vadd.f32 %v834, %v913
    %915 = vmatmul.f32.gmra.mxu0 %v724
    %v916 = vpop.f32.mrf.mxu0
    %v917 = vadd.f32 %v834, %v916
    %918 = vmatmul.f32.gmra.mxu0 %v728
    %v919 = vpop.f32.mrf.mxu0
    %v920 = vadd.f32 %v834, %v919
    %921 = vmatmul.f32.gmra.mxu0 %v732
    %v922 = vpop.f32.mrf.mxu0
    %v923 = vadd.f32 %v834, %v922
    %924 = vmatmul.f32.gmra.mxu0 %v736
    %v925 = vpop.f32.mrf.mxu0
    %v926 = vadd.f32 %v834, %v925
    %927 = vmatmul.f32.gmra.mxu0 %v740
    %v928 = vpop.f32.mrf.mxu0
    %v929 = vadd.f32 %v834, %v928
    %930 = vmatmul.f32.gmra.mxu0 %v744
    %v931 = vpop.f32.mrf.mxu0
    %v932 = vadd.f32 %v834, %v931
    %933 = vmatmul.f32.gmra.mxu0 %v748
    %v934 = vpop.f32.mrf.mxu0
    %v935 = vadd.f32 %v834, %v934
    %936 = vmatmul.f32.gmra.mxu0 %v752
    %v937 = vpop.f32.mrf.mxu0
    %v938 = vadd.f32 %v834, %v937
    %939 = vmatmul.f32.gmra.mxu0 %v756
    %v940 = vpop.f32.mrf.mxu0
    %v941 = vadd.f32 %v834, %v940
    %942 = vmatmul.f32.gmra.mxu0 %v760
    %v943 = vpop.f32.mrf.mxu0
    %v944 = vadd.f32 %v834, %v943
    %945 = vmatmul.f32.gmra.mxu0 %v764
    %v946 = vpop.f32.mrf.mxu0
    %v947 = vadd.f32 %v834, %v946
    %948 = vdwg.mxu0
    %949 = vmatpush.msra.mxu0 %v799
    %950 = vmatpush.msra.mxu0 %v798
    %951 = vmatpush.msra.mxu0 %v797
    %952 = vmatpush.msra.mxu0 %v796
    %953 = vmatpush.msra.mxu0 %v795
    %954 = vmatpush.msra.mxu0 %v794
    %955 = vmatpush.msra.mxu0 %v793
    %956 = vmatpush.msra.mxu0 %v792
    %957 = vmatpush.msra.mxu0 %v791
    %958 = vmatpush.msra.mxu0 %v790
    %959 = vmatpush.msra.mxu0 %v789
    %960 = vmatpush.msra.mxu0 %v788
    %961 = vmatpush.msra.mxu0 %v787
    %962 = vmatpush.msra.mxu0 %v786
    %963 = vmatpush.msra.mxu0 %v785
    %964 = vmatpush.msra.mxu0 %v784
    %965 = vmatmul.f32.gmra.mxu0 %v641
    %v966 = vpop.f32.mrf.mxu0
    %v967 = vadd.f32 %v854, %v966
    %968 = vmatmul.f32.gmra.mxu0 %v645
    %v969 = vpop.f32.mrf.mxu0
    %v970 = vadd.f32 %v857, %v969
    %971 = vmatmul.f32.gmra.mxu0 %v649
    %v972 = vpop.f32.mrf.mxu0
    %v973 = vadd.f32 %v860, %v972
    %974 = vmatmul.f32.gmra.mxu0 %v653
    %v975 = vpop.f32.mrf.mxu0
    %v976 = vadd.f32 %v863, %v975
    %977 = vmatmul.f32.gmra.mxu0 %v657
    %v978 = vpop.f32.mrf.mxu0
    %v979 = vadd.f32 %v866, %v978
    %980 = vmatmul.f32.gmra.mxu0 %v661
    %v981 = vpop.f32.mrf.mxu0
    %v982 = vadd.f32 %v869, %v981
    %983 = vmatmul.f32.gmra.mxu0 %v665
    %v984 = vpop.f32.mrf.mxu0
    %v985 = vadd.f32 %v872, %v984
    %986 = vmatmul.f32.gmra.mxu0 %v669
    %v987 = vpop.f32.mrf.mxu0
    %v988 = vadd.f32 %v875, %v987
    %989 = vmatmul.f32.gmra.mxu0 %v673
    %v990 = vpop.f32.mrf.mxu0
    %v991 = vadd.f32 %v878, %v990
    %992 = vmatmul.f32.gmra.mxu0 %v677
    %v993 = vpop.f32.mrf.mxu0
    %v994 = vadd.f32 %v881, %v993
    %995 = vmatmul.f32.gmra.mxu0 %v681
    %v996 = vpop.f32.mrf.mxu0
    %v997 = vadd.f32 %v884, %v996
    %998 = vmatmul.f32.gmra.mxu0 %v685
    %v999 = vpop.f32.mrf.mxu0
    %v1000 = vadd.f32 %v887, %v999
    %1001 = vmatmul.f32.gmra.mxu0 %v689
    %v1002 = vpop.f32.mrf.mxu0
    %v1003 = vadd.f32 %v890, %v1002
    %1004 = vmatmul.f32.gmra.mxu0 %v693
    %v1005 = vpop.f32.mrf.mxu0
    %v1006 = vadd.f32 %v893, %v1005
    %1007 = vmatmul.f32.gmra.mxu0 %v697
    %v1008 = vpop.f32.mrf.mxu0
    %v1009 = vadd.f32 %v896, %v1008
    %1010 = vmatmul.f32.gmra.mxu0 %v701
    %v1011 = vpop.f32.mrf.mxu0
    %v1012 = vadd.f32 %v899, %v1011
    %1013 = vmatmul.f32.gmra.mxu0 %v705
    %v1014 = vpop.f32.mrf.mxu0
    %v1015 = vadd.f32 %v902, %v1014
    %1016 = vmatmul.f32.gmra.mxu0 %v709
    %v1017 = vpop.f32.mrf.mxu0
    %v1018 = vadd.f32 %v905, %v1017
    %1019 = vmatmul.f32.gmra.mxu0 %v713
    %v1020 = vpop.f32.mrf.mxu0
    %v1021 = vadd.f32 %v908, %v1020
    %1022 = vmatmul.f32.gmra.mxu0 %v717
    %v1023 = vpop.f32.mrf.mxu0
    %v1024 = vadd.f32 %v911, %v1023
    %1025 = vmatmul.f32.gmra.mxu0 %v721
    %v1026 = vpop.f32.mrf.mxu0
    %v1027 = vadd.f32 %v914, %v1026
    %1028 = vmatmul.f32.gmra.mxu0 %v725
    %v1029 = vpop.f32.mrf.mxu0
    %v1030 = vadd.f32 %v917, %v1029
    %1031 = vmatmul.f32.gmra.mxu0 %v729
    %v1032 = vpop.f32.mrf.mxu0
    %v1033 = vadd.f32 %v920, %v1032
    %1034 = vmatmul.f32.gmra.mxu0 %v733
    %v1035 = vpop.f32.mrf.mxu0
    %v1036 = vadd.f32 %v923, %v1035
    %1037 = vmatmul.f32.gmra.mxu0 %v737
    %v1038 = vpop.f32.mrf.mxu0
    %v1039 = vadd.f32 %v926, %v1038
    %1040 = vmatmul.f32.gmra.mxu0 %v741
    %v1041 = vpop.f32.mrf.mxu0
    %v1042 = vadd.f32 %v929, %v1041
    %1043 = vmatmul.f32.gmra.mxu0 %v745
    %v1044 = vpop.f32.mrf.mxu0
    %v1045 = vadd.f32 %v932, %v1044
    %1046 = vmatmul.f32.gmra.mxu0 %v749
    %v1047 = vpop.f32.mrf.mxu0
    %v1048 = vadd.f32 %v935, %v1047
    %1049 = vmatmul.f32.gmra.mxu0 %v753
    %v1050 = vpop.f32.mrf.mxu0
    %v1051 = vadd.f32 %v938, %v1050
    %1052 = vmatmul.f32.gmra.mxu0 %v757
    %v1053 = vpop.f32.mrf.mxu0
    %v1054 = vadd.f32 %v941, %v1053
    %1055 = vmatmul.f32.gmra.mxu0 %v761
    %v1056 = vpop.f32.mrf.mxu0
    %v1057 = vadd.f32 %v944, %v1056
    %1058 = vmatmul.f32.gmra.mxu0 %v765
    %v1059 = vpop.f32.mrf.mxu0
    %v1060 = vadd.f32 %v947, %v1059
    %1061 = vdwg.mxu0
    %1062 = vmatpush.msra.mxu0 %v815
    %1063 = vmatpush.msra.mxu0 %v814
    %1064 = vmatpush.msra.mxu0 %v813
    %1065 = vmatpush.msra.mxu0 %v812
    %1066 = vmatpush.msra.mxu0 %v811
    %1067 = vmatpush.msra.mxu0 %v810
    %1068 = vmatpush.msra.mxu0 %v809
    %1069 = vmatpush.msra.mxu0 %v808
    %1070 = vmatpush.msra.mxu0 %v807
    %1071 = vmatpush.msra.mxu0 %v806
    %1072 = vmatpush.msra.mxu0 %v805
    %1073 = vmatpush.msra.mxu0 %v804
    %1074 = vmatpush.msra.mxu0 %v803
    %1075 = vmatpush.msra.mxu0 %v802
    %1076 = vmatpush.msra.mxu0 %v801
    %1077 = vmatpush.msra.mxu0 %v800
    %1078 = vmatmul.f32.gmra.mxu0 %v642
    %v1079 = vpop.f32.mrf.mxu0
    %v1080 = vadd.f32 %v967, %v1079
    %1081 = vmatmul.f32.gmra.mxu0 %v646
    %v1082 = vpop.f32.mrf.mxu0
    %v1083 = vadd.f32 %v970, %v1082
    %1084 = vmatmul.f32.gmra.mxu0 %v650
    %v1085 = vpop.f32.mrf.mxu0
    %v1086 = vadd.f32 %v973, %v1085
    %1087 = vmatmul.f32.gmra.mxu0 %v654
    %v1088 = vpop.f32.mrf.mxu0
    %v1089 = vadd.f32 %v976, %v1088
    %1090 = vmatmul.f32.gmra.mxu0 %v658
    %v1091 = vpop.f32.mrf.mxu0
    %v1092 = vadd.f32 %v979, %v1091
    %1093 = vmatmul.f32.gmra.mxu0 %v662
    %v1094 = vpop.f32.mrf.mxu0
    %v1095 = vadd.f32 %v982, %v1094
    %1096 = vmatmul.f32.gmra.mxu0 %v666
    %v1097 = vpop.f32.mrf.mxu0
    %v1098 = vadd.f32 %v985, %v1097
    %1099 = vmatmul.f32.gmra.mxu0 %v670
    %v1100 = vpop.f32.mrf.mxu0
    %v1101 = vadd.f32 %v988, %v1100
    %1102 = vmatmul.f32.gmra.mxu0 %v674
    %v1103 = vpop.f32.mrf.mxu0
    %v1104 = vadd.f32 %v991, %v1103
    %1105 = vmatmul.f32.gmra.mxu0 %v678
    %v1106 = vpop.f32.mrf.mxu0
    %v1107 = vadd.f32 %v994, %v1106
    %1108 = vmatmul.f32.gmra.mxu0 %v682
    %v1109 = vpop.f32.mrf.mxu0
    %v1110 = vadd.f32 %v997, %v1109
    %1111 = vmatmul.f32.gmra.mxu0 %v686
    %v1112 = vpop.f32.mrf.mxu0
    %v1113 = vadd.f32 %v1000, %v1112
    %1114 = vmatmul.f32.gmra.mxu0 %v690
    %v1115 = vpop.f32.mrf.mxu0
    %v1116 = vadd.f32 %v1003, %v1115
    %1117 = vmatmul.f32.gmra.mxu0 %v694
    %v1118 = vpop.f32.mrf.mxu0
    %v1119 = vadd.f32 %v1006, %v1118
    %1120 = vmatmul.f32.gmra.mxu0 %v698
    %v1121 = vpop.f32.mrf.mxu0
    %v1122 = vadd.f32 %v1009, %v1121
    %1123 = vmatmul.f32.gmra.mxu0 %v702
    %v1124 = vpop.f32.mrf.mxu0
    %v1125 = vadd.f32 %v1012, %v1124
    %1126 = vmatmul.f32.gmra.mxu0 %v706
    %v1127 = vpop.f32.mrf.mxu0
    %v1128 = vadd.f32 %v1015, %v1127
    %1129 = vmatmul.f32.gmra.mxu0 %v710
    %v1130 = vpop.f32.mrf.mxu0
    %v1131 = vadd.f32 %v1018, %v1130
    %1132 = vmatmul.f32.gmra.mxu0 %v714
    %v1133 = vpop.f32.mrf.mxu0
    %v1134 = vadd.f32 %v1021, %v1133
    %1135 = vmatmul.f32.gmra.mxu0 %v718
    %v1136 = vpop.f32.mrf.mxu0
    %v1137 = vadd.f32 %v1024, %v1136
    %1138 = vmatmul.f32.gmra.mxu0 %v722
    %v1139 = vpop.f32.mrf.mxu0
    %v1140 = vadd.f32 %v1027, %v1139
    %1141 = vmatmul.f32.gmra.mxu0 %v726
    %v1142 = vpop.f32.mrf.mxu0
    %v1143 = vadd.f32 %v1030, %v1142
    %1144 = vmatmul.f32.gmra.mxu0 %v730
    %v1145 = vpop.f32.mrf.mxu0
    %v1146 = vadd.f32 %v1033, %v1145
    %1147 = vmatmul.f32.gmra.mxu0 %v734
    %v1148 = vpop.f32.mrf.mxu0
    %v1149 = vadd.f32 %v1036, %v1148
    %1150 = vmatmul.f32.gmra.mxu0 %v738
    %v1151 = vpop.f32.mrf.mxu0
    %v1152 = vadd.f32 %v1039, %v1151
    %1153 = vmatmul.f32.gmra.mxu0 %v742
    %v1154 = vpop.f32.mrf.mxu0
    %v1155 = vadd.f32 %v1042, %v1154
    %1156 = vmatmul.f32.gmra.mxu0 %v746
    %v1157 = vpop.f32.mrf.mxu0
    %v1158 = vadd.f32 %v1045, %v1157
    %1159 = vmatmul.f32.gmra.mxu0 %v750
    %v1160 = vpop.f32.mrf.mxu0
    %v1161 = vadd.f32 %v1048, %v1160
    %1162 = vmatmul.f32.gmra.mxu0 %v754
    %v1163 = vpop.f32.mrf.mxu0
    %v1164 = vadd.f32 %v1051, %v1163
    %1165 = vmatmul.f32.gmra.mxu0 %v758
    %v1166 = vpop.f32.mrf.mxu0
    %v1167 = vadd.f32 %v1054, %v1166
    %1168 = vmatmul.f32.gmra.mxu0 %v762
    %v1169 = vpop.f32.mrf.mxu0
    %v1170 = vadd.f32 %v1057, %v1169
    %1171 = vmatmul.f32.gmra.mxu0 %v766
    %v1172 = vpop.f32.mrf.mxu0
    %v1173 = vadd.f32 %v1060, %v1172
    %1174 = vdwg.mxu0
    %1175 = vmatpush.msra.mxu0 %v831
    %1176 = vmatpush.msra.mxu0 %v830
    %1177 = vmatpush.msra.mxu0 %v829
    %1178 = vmatpush.msra.mxu0 %v828
    %1179 = vmatpush.msra.mxu0 %v827
    %1180 = vmatpush.msra.mxu0 %v826
    %1181 = vmatpush.msra.mxu0 %v825
    %1182 = vmatpush.msra.mxu0 %v824
    %1183 = vmatpush.msra.mxu0 %v823
    %1184 = vmatpush.msra.mxu0 %v822
    %1185 = vmatpush.msra.mxu0 %v821
    %1186 = vmatpush.msra.mxu0 %v820
    %1187 = vmatpush.msra.mxu0 %v819
    %1188 = vmatpush.msra.mxu0 %v818
    %1189 = vmatpush.msra.mxu0 %v817
    %1190 = vmatpush.msra.mxu0 %v816
    %1191 = vmatmul.f32.gmra.mxu0 %v643
    %v1192 = vpop.f32.mrf.mxu0
    %v1193 = vadd.f32 %v1080, %v1192
    %1194 = vmatmul.f32.gmra.mxu0 %v647
    %v1195 = vpop.f32.mrf.mxu0
    %v1196 = vadd.f32 %v1083, %v1195
    %1197 = vmatmul.f32.gmra.mxu0 %v651
    %v1198 = vpop.f32.mrf.mxu0
    %v1199 = vadd.f32 %v1086, %v1198
    %1200 = vmatmul.f32.gmra.mxu0 %v655
    %v1201 = vpop.f32.mrf.mxu0
    %v1202 = vadd.f32 %v1089, %v1201
    %1203 = vmatmul.f32.gmra.mxu0 %v659
    %v1204 = vpop.f32.mrf.mxu0
    %v1205 = vadd.f32 %v1092, %v1204
    %1206 = vmatmul.f32.gmra.mxu0 %v663
    %v1207 = vpop.f32.mrf.mxu0
    %v1208 = vadd.f32 %v1095, %v1207
    %1209 = vmatmul.f32.gmra.mxu0 %v667
    %v1210 = vpop.f32.mrf.mxu0
    %v1211 = vadd.f32 %v1098, %v1210
    %1212 = vmatmul.f32.gmra.mxu0 %v671
    %v1213 = vpop.f32.mrf.mxu0
    %v1214 = vadd.f32 %v1101, %v1213
    %1215 = vmatmul.f32.gmra.mxu0 %v675
    %v1216 = vpop.f32.mrf.mxu0
    %v1217 = vadd.f32 %v1104, %v1216
    %1218 = vmatmul.f32.gmra.mxu0 %v679
    %v1219 = vpop.f32.mrf.mxu0
    %v1220 = vadd.f32 %v1107, %v1219
    %1221 = vmatmul.f32.gmra.mxu0 %v683
    %v1222 = vpop.f32.mrf.mxu0
    %v1223 = vadd.f32 %v1110, %v1222
    %1224 = vmatmul.f32.gmra.mxu0 %v687
    %v1225 = vpop.f32.mrf.mxu0
    %v1226 = vadd.f32 %v1113, %v1225
    %1227 = vmatmul.f32.gmra.mxu0 %v691
    %v1228 = vpop.f32.mrf.mxu0
    %v1229 = vadd.f32 %v1116, %v1228
    %1230 = vmatmul.f32.gmra.mxu0 %v695
    %v1231 = vpop.f32.mrf.mxu0
    %v1232 = vadd.f32 %v1119, %v1231
    %1233 = vmatmul.f32.gmra.mxu0 %v699
    %v1234 = vpop.f32.mrf.mxu0
    %v1235 = vadd.f32 %v1122, %v1234
    %1236 = vmatmul.f32.gmra.mxu0 %v703
    %v1237 = vpop.f32.mrf.mxu0
    %v1238 = vadd.f32 %v1125, %v1237
    %1239 = vmatmul.f32.gmra.mxu0 %v707
    %v1240 = vpop.f32.mrf.mxu0
    %v1241 = vadd.f32 %v1128, %v1240
    %1242 = vmatmul.f32.gmra.mxu0 %v711
    %v1243 = vpop.f32.mrf.mxu0
    %v1244 = vadd.f32 %v1131, %v1243
    %1245 = vmatmul.f32.gmra.mxu0 %v715
    %v1246 = vpop.f32.mrf.mxu0
    %v1247 = vadd.f32 %v1134, %v1246
    %1248 = vmatmul.f32.gmra.mxu0 %v719
    %v1249 = vpop.f32.mrf.mxu0
    %v1250 = vadd.f32 %v1137, %v1249
    %1251 = vmatmul.f32.gmra.mxu0 %v723
    %v1252 = vpop.f32.mrf.mxu0
    %v1253 = vadd.f32 %v1140, %v1252
    %1254 = vmatmul.f32.gmra.mxu0 %v727
    %v1255 = vpop.f32.mrf.mxu0
    %v1256 = vadd.f32 %v1143, %v1255
    %1257 = vmatmul.f32.gmra.mxu0 %v731
    %v1258 = vpop.f32.mrf.mxu0
    %v1259 = vadd.f32 %v1146, %v1258
    %1260 = vmatmul.f32.gmra.mxu0 %v735
    %v1261 = vpop.f32.mrf.mxu0
    %v1262 = vadd.f32 %v1149, %v1261
    %1263 = vmatmul.f32.gmra.mxu0 %v739
    %v1264 = vpop.f32.mrf.mxu0
    %v1265 = vadd.f32 %v1152, %v1264
    %1266 = vmatmul.f32.gmra.mxu0 %v743
    %v1267 = vpop.f32.mrf.mxu0
    %v1268 = vadd.f32 %v1155, %v1267
    %1269 = vmatmul.f32.gmra.mxu0 %v747
    %v1270 = vpop.f32.mrf.mxu0
    %v1271 = vadd.f32 %v1158, %v1270
    %1272 = vmatmul.f32.gmra.mxu0 %v751
    %v1273 = vpop.f32.mrf.mxu0
    %v1274 = vadd.f32 %v1161, %v1273
    %1275 = vmatmul.f32.gmra.mxu0 %v755
    %v1276 = vpop.f32.mrf.mxu0
    %v1277 = vadd.f32 %v1164, %v1276
    %1278 = vmatmul.f32.gmra.mxu0 %v759
    %v1279 = vpop.f32.mrf.mxu0
    %v1280 = vadd.f32 %v1167, %v1279
    %1281 = vmatmul.f32.gmra.mxu0 %v763
    %v1282 = vpop.f32.mrf.mxu0
    %v1283 = vadd.f32 %v1170, %v1282
    %1284 = vmatmul.f32.gmra.mxu0 %v767
    %v1285 = vpop.f32.mrf.mxu0
    %v1286 = vadd.f32 %v1173, %v1285
    %1287 = vdwg.mxu0
    %1288 = vst [vmem:[#allocation10] sm:$0xff] %v1193
    %1289 = vst [vmem:[#allocation10 + $0x8] sm:$0xff] %v1196
    %1290 = vst [vmem:[#allocation10 + $0x10] sm:$0xff] %v1199
    %1291 = vst [vmem:[#allocation10 + $0x18] sm:$0xff] %v1202
    %1292 = vst [vmem:[#allocation10 + $0x20] sm:$0xff] %v1205
    %1293 = vst [vmem:[#allocation10 + $0x28] sm:$0xff] %v1208
    %1294 = vst [vmem:[#allocation10 + $0x30] sm:$0xff] %v1211
    %1295 = vst [vmem:[#allocation10 + $0x38] sm:$0xff] %v1214
    %1296 = vst [vmem:[#allocation10 + $0x40] sm:$0xff] %v1217
    %1297 = vst [vmem:[#allocation10 + $0x48] sm:$0xff] %v1220
    %1298 = vst [vmem:[#allocation10 + $0x50] sm:$0xff] %v1223
    %1299 = vst [vmem:[#allocation10 + $0x58] sm:$0xff] %v1226
    %1300 = vst [vmem:[#allocation10 + $0x60] sm:$0xff] %v1229
    %1301 = vst [vmem:[#allocation10 + $0x68] sm:$0xff] %v1232
    %1302 = vst [vmem:[#allocation10 + $0x70] sm:$0xff] %v1235
    %1303 = vst [vmem:[#allocation10 + $0x78] sm:$0xff] %v1238
    %1304 = vst [vmem:[#allocation10 + $0x80] sm:$0xff] %v1241
    %1305 = vst [vmem:[#allocation10 + $0x88] sm:$0xff] %v1244
    %1306 = vst [vmem:[#allocation10 + $0x90] sm:$0xff] %v1247
    %1307 = vst [vmem:[#allocation10 + $0x98] sm:$0xff] %v1250
    %1308 = vst [vmem:[#allocation10 + $0xa0] sm:$0xff] %v1253
    %1309 = vst [vmem:[#allocation10 + $0xa8] sm:$0xff] %v1256
    %1310 = vst [vmem:[#allocation10 + $0xb0] sm:$0xff] %v1259
    %1311 = vst [vmem:[#allocation10 + $0xb8] sm:$0xff] %v1262
    %1312 = vst [vmem:[#allocation10 + $0xc0] sm:$0xff] %v1265
    %1313 = vst [vmem:[#allocation10 + $0xc8] sm:$0xff] %v1268
    %1314 = vst [vmem:[#allocation10 + $0xd0] sm:$0xff] %v1271
    %1315 = vst [vmem:[#allocation10 + $0xd8] sm:$0xff] %v1274
    %1316 = vst [vmem:[#allocation10 + $0xe0] sm:$0xff] %v1277
    %1317 = vst [vmem:[#allocation10 + $0xe8] sm:$0xff] %v1280
    %1318 = vst [vmem:[#allocation10 + $0xf0] sm:$0xff] %v1283
    %1319 = vst [vmem:[#allocation10 + $0xf8] sm:$0xff] %v1286
    // Predicated region
    $region38: #{tpu_custom_call.1} parent=1 // pred_check
      _
    $region39: #{tpu_custom_call.1} parent=1 // pred_check_branch
      %1321 = sbr.rel (0) target = $region41
    $region40: #{tpu_custom_call.1} parent=1 // pred_region
      %1323 = vsyncadd [#allocation4], 0
      %s1324 = sshll.u32 [#allocation10], 4
      %s1325 = int_to_ptr.vmem [resolvable:$true] %s1324
      %s1326 = sshll.u32 %s5, 4
      %s1327 = int_to_ptr.hbm [resolvable:$true] %s1326
      %1332 = dma.vmem_to_hbm [thread:$0]  %s1325, 4096, %s1327, [#allocation4], 128, 128, 8
    $region41: #{tpu_custom_call.1} parent=1 // pred_fallthru
      _
    // Predicated region
    $region42: #{tpu_custom_call.1} parent=1 // pred_check
      _
    $region43: #{tpu_custom_call.1} parent=1 // pred_check_branch
      %1334 = sbr.rel (0) target = $region45
    $region44: #{tpu_custom_call.1} parent=1 // pred_region
      %1336 = dma.done [#allocation4], 4096
    $region45: #{tpu_custom_call.1} parent=1 // pred_fallthru
      _
    %1337 = vsyncpa [#allocation3], 1
    %1338 = vsyncpa [#allocation6], 1
    %1339 = vsyncpa [#allocation9], 1
    %1340 = vsyncpa [#allocation4], 1

</llo_original>
